<compile_context>
chip_gen: v7x
topology: tpu7x:2x2x1
jax: 0.10.0
libtpu: 0.0.40
codegen_flags: <defaults>
</compile_context>

<pallas_src>
import numpy as np
import jax
import jax.numpy as jnp
from jax.experimental import pallas as pl
from jax.experimental.pallas import tpu as pltpu

# ---------------- config (small, deterministic, AST-style) ----------------
SAMPLE_RATE = 16000
N_MELS = 64                 # AST default is 128; kept small for the test
PREEMPH = 0.97
LOW_FREQ = 20.0
EPS = 1.1920928955078125e-07  # torch.finfo(torch.float32).eps

WIN = int(SAMPLE_RATE * 25.0 * 0.001)               # 400  (25 ms)
SHIFT = int(SAMPLE_RATE * 10.0 * 0.001)              # 160  (10 ms)
NFFT = 1 << (WIN - 1).bit_length()                   # 512  (round_to_power_of_two)
NBINS = NFFT // 2 + 1                                 # 257  rfft bins

WPAD = 512                  # frame length padded to a clean MXU-K multiple
FPAD = 384                  # lane-padded bin count (zeros beyond NBINS), 3x128
MELPAD = 128                # lane-dense output width; real mels are columns [:N_MELS]


# ---------------- host-side (numpy, float64) parameter tables ----------------
def _mel_banks_f64():
    """Kaldi mel filterbank, shape (N_MELS, NFFT//2) — Nyquist bin excluded."""
    num_fft_bins = NFFT // 2
    nyquist = 0.5 * SAMPLE_RATE
    fft_bin_width = SAMPLE_RATE / NFFT
    mel = lambda f: 1127.0 * np.log(1.0 + f / 700.0)
    mel_low, mel_high = mel(LOW_FREQ), mel(nyquist)
    mel_delta = (mel_high - mel_low) / (N_MELS + 1)
    b = np.arange(N_MELS, dtype=np.float64)[:, None]
    left = mel_low + b * mel_delta
    center = mel_low + (b + 1.0) * mel_delta
    right = mel_low + (b + 2.0) * mel_delta
    bin_mel = mel(fft_bin_width * np.arange(num_fft_bins, dtype=np.float64))[None, :]
    up = (bin_mel - left) / (center - left)
    down = (right - bin_mel) / (right - center)
    return np.maximum(0.0, np.minimum(up, down))      # (N_MELS, 256)


def _build_tables():
    # Hann window, torch.hann_window(WIN, periodic=False)
    i = np.arange(WIN, dtype=np.float64)
    hann = 0.5 - 0.5 * np.cos(2.0 * np.pi * i / (WIN - 1))

    # Fused real-DFT table [cos | -sin] of the 512-pt DFT (only the first WIN rows matter).
    n = np.arange(WIN, dtype=np.float64)[:, None]
    k = np.arange(NBINS, dtype=np.float64)[None, :]
    ang = 2.0 * np.pi * n * k / NFFT
    cs = np.concatenate([np.cos(ang), -np.sin(ang)], axis=1)        # (WIN, 2*NBINS)

    # Fold the per-frame linear pre-processing into the table:
    #   y = cs^T @ diag(hann) @ A @ D @ x   =>   y = (D^T A^T diag(hann) cs)^T @ x
    #   D: per-frame DC removal, A: pre-emphasis with replicate-first-sample padding.
    A = np.eye(WIN) - PREEMPH * np.eye(WIN, k=-1)
    A[0, 0] -= PREEMPH
    D = np.eye(WIN) - np.ones((WIN, WIN)) / WIN
    T = D.T @ (A.T @ (hann[:, None] * cs))                          # (WIN, 2*NBINS)

    dft = np.zeros((WPAD, 2 * FPAD), np.float32)
    dft[:WIN, :NBINS] = T[:, :NBINS].astype(np.float32)
    dft[:WIN, FPAD:FPAD + NBINS] = T[:, NBINS:].astype(np.float32)

    # Mel filterbank, lane-dense (FPAD, MELPAD); Nyquist bin row and cols >= N_MELS zero.
    fb = _mel_banks_f64()                                           # (N_MELS, 256)
    mel_fb = np.zeros((FPAD, MELPAD), np.float32)
    mel_fb[:NFFT // 2, :N_MELS] = fb.T.astype(np.float32)
    return dft, mel_fb


_DFT_TABLE, _MEL_TABLE = _build_tables()


# ---------------- Pallas kernel ----------------
def _fbank_kernel(frames_ref, dft_ref, mel_ref, out_ref):
    # frames_ref : (1, TM, WPAD)   zero-padded raw frame tile
    # dft_ref    : (WPAD, 2*FPAD)  folded [DC-removal * preemph * Hann * cos|-sin] table
    # mel_ref    : (FPAD, MELPAD)  mel filterbank (lane-dense, zero-padded cols/rows)
    # out_ref    : (1, TM, MELPAD)
    x = frames_ref[0]                                              # (TM, WPAD)

    # All per-frame linear pre-processing is folded into dft_ref: one 768-wide MXU matmul.
    # TODO(synk): optional bf16 cast of the operands (~3x MXU on v6e/v7x) is an accuracy
    # trade that would need re-validation against the tolerance.
    y = jnp.dot(x, dft_ref[...], preferred_element_type=jnp.float32)   # (TM, 2*FPAD)
    re = y[:, :FPAD]                                               # 128-aligned views
    im = y[:, FPAD:]
    power = re * re + im * im                                      # (TM, FPAD)
    mel = jnp.dot(power, mel_ref[...], preferred_element_type=jnp.float32)  # (TM, MELPAD)
    out_ref[0] = jnp.log(jnp.maximum(mel, EPS))


@jax.jit
def ast_feature(waveforms):
    """waveforms: (B, N) or (N,) float32 -> (B, M, N_MELS) float32 log-mel fbanks."""
    if waveforms.ndim == 1:
        waveforms = waveforms[None, :]
    waveforms = waveforms.astype(jnp.float32)
    B, N = waveforms.shape
    M = 1 + (N - WIN) // SHIFT                                     # snip_edges=True
    # NOTE: the whole-waveform mean subtraction of the module is mathematically cancelled
    # by the per-frame DC removal folded into the DFT table, so it is dropped here.

    # frame-tile size: multiple of 8, capped at 256 (bounded VMEM, double-buffered DMA)
    TM = min(256, ((M + 7) // 8) * 8)
    n_mtiles = -(-M // TM)
    M_pad = n_mtiles * TM

    # glue: overlapped framing via reshape + static slices + concat (no gather).
    # frames[m, q*SHIFT + r] = wav[(m+q)*SHIFT + r]
    # TODO(synk): streaming the raw waveform via pl.ANY + manual DMA (overlapping windows
    # are not expressible with Blocked BlockSpecs) would cut the ~2.5x framing HBM traffic.
    q_full = WIN // SHIFT                                          # 2
    rem = WIN - q_full * SHIFT                                     # 80
    n_chunks = M + q_full - (0 if rem else 1)
    target = n_chunks * SHIFT
    pad_amt = max(0, target - N)
    wav_p = jnp.pad(waveforms, ((0, 0), (0, pad_amt)))[:, :target]
    chunks = wav_p.reshape(B, n_chunks, SHIFT)
    parts = [chunks[:, q:q + M, :] for q in range(q_full)]
    if rem:
        parts.append(chunks[:, q_full:q_full + M, :rem])
    frames = jnp.concatenate(parts, axis=-1)                       # (B, M, WIN)
    frames = jnp.pad(frames, ((0, 0), (0, M_pad - M), (0, WPAD - WIN)))

    dft = jnp.asarray(_DFT_TABLE)
    mel_fb = jnp.asarray(_MEL_TABLE)

    out = pl.pallas_call(
        _fbank_kernel,
        out_shape=jax.ShapeDtypeStruct((B, M_pad, MELPAD), jnp.float32),
        grid_spec=pltpu.PrefetchScalarGridSpec(
            num_scalar_prefetch=0,
            grid=(B, n_mtiles),
            in_specs=[
                pl.BlockSpec((1, TM, WPAD), lambda b, m: (b, m, 0)),
                pl.BlockSpec((WPAD, 2 * FPAD), lambda b, m: (0, 0)),
                pl.BlockSpec((FPAD, MELPAD), lambda b, m: (0, 0)),
            ],
            out_specs=pl.BlockSpec((1, TM, MELPAD), lambda b, m: (b, m, 0)),
        ),
        compiler_params=pltpu.CompilerParams(
            dimension_semantics=("parallel", "parallel"),
        ),
    )(frames, dft, mel_fb)

    # slice off padded frames / padded mel columns (lane-dense store in the kernel)
    return out[:, :M, :N_MELS]


# ---------------- pure numpy float64 reference (mirrors the PyTorch module) ----------------
def ast_feature_ref(waveforms_np):
    w = np.asarray(waveforms_np, np.float64)
    B, N = w.shape
    M = 1 + (N - WIN) // SHIFT
    w = w - w.mean(axis=1, keepdims=True)                          # whole-waveform mean
    idx = np.arange(M)[:, None] * SHIFT + np.arange(WIN)[None, :]
    x = w[:, idx]                                                  # (B, M, WIN)
    x = x - x.mean(axis=-1, keepdims=True)                         # per-frame DC removal
    prev = np.concatenate([x[..., :1], x[..., :-1]], axis=-1)      # replicate first sample
    x = x - PREEMPH * prev                                         # pre-emphasis
    i = np.arange(WIN, dtype=np.float64)
    hann = 0.5 - 0.5 * np.cos(2.0 * np.pi * i / (WIN - 1))
    x = x * hann                                                   # Hann window
    spec = np.fft.rfft(x, n=NFFT, axis=-1)                         # (B, M, 257)
    power = np.abs(spec) ** 2
    fb = np.concatenate([_mel_banks_f64(), np.zeros((N_MELS, 1))], axis=1)  # (N_MELS, 257)
    mel = power @ fb.T
    return np.log(np.maximum(mel, EPS))


if __name__ == "__main__":
    key = jax.random.PRNGKey(0)
    B, N = 2, 2000                                   # ~0.125 s of 16 kHz audio -> M = 11 frames
    waveforms = 0.1 * jax.random.normal(key, (B, N), dtype=jnp.float32)

    out = jax.block_until_ready(ast_feature(waveforms))
    ref = ast_feature_ref(np.asarray(waveforms))

    M = 1 + (N - WIN) // SHIFT
    assert out.shape == (B, M, N_MELS), out.shape
    assert bool(jnp.all(jnp.isfinite(out)))
    err = float(np.max(np.abs(np.asarray(out, np.float64) - ref)))
    # tolerance sized for worst-case MXU f32 (bf16-pass) matmul precision vs exact f64 ref
    assert err < 2e-2, err

    print("KERNEL_OK")
</pallas_src>

<mosaic_0001>
module attributes {stable_mosaic.version = 11 : i64} {
  func.func @_fbank_kernel(%arg0: i32, %arg1: i32, %arg2: memref<1x16x512xf32, #tpu.memory_space<vmem>>, %arg3: memref<512x768xf32, #tpu.memory_space<vmem>>, %arg4: memref<384x128xf32, #tpu.memory_space<vmem>>, %arg5: memref<1x16x128xf32, #tpu.memory_space<vmem>>) attributes {dimension_semantics = [#tpu.dimension_semantics<parallel>, #tpu.dimension_semantics<parallel>], iteration_bounds = array<i64: 2, 1>, scalar_prefetch = 0 : i64, scratch_operands = 0 : i64, tpu.core_type = #tpu.core_type<tc>, window_params = [{transform_indices = @transform_0, window_bounds = array<i64: 1, 16, 512>}, {pipeline_mode = #tpu.pipeline_mode<synchronous>, transform_indices = @transform_1, window_bounds = array<i64: 512, 768>}, {pipeline_mode = #tpu.pipeline_mode<synchronous>, transform_indices = @transform_2, window_bounds = array<i64: 384, 128>}, {transform_indices = @transform_3, window_bounds = array<i64: 1, 16, 128>}]} {
    %c0 = arith.constant 0 : index
    %c0_0 = arith.constant 0 : index
    %c0_1 = arith.constant 0 : index
    %0 = vector.load %arg2[%c0, %c0_0, %c0_1] : memref<1x16x512xf32, #tpu.memory_space<vmem>>, vector<1x16x512xf32>
    %1 = vector.shape_cast %0 : vector<1x16x512xf32> to vector<16x512xf32>
    %c0_2 = arith.constant 0 : index
    %c0_3 = arith.constant 0 : index
    %2 = vector.load %arg3[%c0_2, %c0_3] : memref<512x768xf32, #tpu.memory_space<vmem>>, vector<512x768xf32>
    %cst = arith.constant dense<0.000000e+00> : vector<16x768xf32>
    %3 = tpu.matmul %1, %2, %cst {dimension_numbers = #tpu.dot_dimension_numbers<[1], [0], [0], [1], [0, 0, 1, 1], [], []>} : vector<16x512xf32>, vector<512x768xf32>, vector<16x768xf32> -> vector<16x768xf32>
    %4 = vector.extract_strided_slice %3 {offsets = [0, 0], sizes = [16, 384], strides = [1, 1]} : vector<16x768xf32> to vector<16x384xf32>
    %5 = vector.extract_strided_slice %3 {offsets = [0, 384], sizes = [16, 384], strides = [1, 1]} : vector<16x768xf32> to vector<16x384xf32>
    %6 = arith.mulf %4, %4 : vector<16x384xf32>
    %7 = arith.mulf %5, %5 : vector<16x384xf32>
    %8 = arith.addf %6, %7 : vector<16x384xf32>
    %c0_4 = arith.constant 0 : index
    %c0_5 = arith.constant 0 : index
    %9 = vector.load %arg4[%c0_4, %c0_5] : memref<384x128xf32, #tpu.memory_space<vmem>>, vector<384x128xf32>
    %cst_6 = arith.constant dense<0.000000e+00> : vector<16x128xf32>
    %10 = tpu.matmul %8, %9, %cst_6 {dimension_numbers = #tpu.dot_dimension_numbers<[1], [0], [0], [1], [0, 0, 1, 1], [], []>} : vector<16x384xf32>, vector<384x128xf32>, vector<16x128xf32> -> vector<16x128xf32>
    %cst_7 = arith.constant 1.1920929E-7 : f32
    %11 = vector.broadcast %cst_7 : f32 to vector<16x128xf32>
    %12 = arith.maximumf %10, %11 : vector<16x128xf32>
    %13 = math.log %12 : vector<16x128xf32>
    %c0_8 = arith.constant 0 : index
    %c0_9 = arith.constant 0 : index
    %c0_10 = arith.constant 0 : index
    %14 = vector.load %arg5[%c0_8, %c0_9, %c0_10] : memref<1x16x128xf32, #tpu.memory_space<vmem>>, vector<1x16x128xf32>
    %15 = vector.shape_cast %14 : vector<1x16x128xf32> to vector<16x128xf32>
    %16 = vector.shape_cast %13 : vector<16x128xf32> to vector<1x16x128xf32>
    tpu.vector_store %arg5[%c0_8, %c0_9, %c0_10], %16 {strides = array<i32>} : memref<1x16x128xf32, #tpu.memory_space<vmem>>, vector<1x16x128xf32>,
    return
  }
  func.func @transform_0(%arg0: i32, %arg1: i32) -> (i32, i32, i32) {
    %c0_i32 = arith.constant 0 : i32
    %c0_i32_0 = arith.constant 0 : i32
    return %arg0, %arg1, %c0_i32 : i32, i32, i32
  }
  func.func @transform_1(%arg0: i32, %arg1: i32) -> (i32, i32) {
    %c0_i32 = arith.constant 0 : i32
    %c0_i32_0 = arith.constant 0 : i32
    %c0_i32_1 = arith.constant 0 : i32
    return %c0_i32, %c0_i32_0 : i32, i32
  }
  func.func @transform_2(%arg0: i32, %arg1: i32) -> (i32, i32) {
    %c0_i32 = arith.constant 0 : i32
    %c0_i32_0 = arith.constant 0 : i32
    %c0_i32_1 = arith.constant 0 : i32
    return %c0_i32, %c0_i32_0 : i32, i32
  }
  func.func @transform_3(%arg0: i32, %arg1: i32) -> (i32, i32, i32) {
    %c0_i32 = arith.constant 0 : i32
    %c0_i32_0 = arith.constant 0 : i32
    return %arg0, %arg1, %c0_i32 : i32, i32, i32
  }
}

</mosaic_0001>

<llo_original>
// kernel: ast_feature.1
$region0: #{ast_feature.1}
  #allocation0 [shape = 'u32[]', space=smem, size = 0x4, offset = 0x4, fixed_abs, tag = 'smem constant byte address 0x4 - core index']
  #allocation1 [shape = 'u32[144,128]{1,0:T(1,128)}', space=vmem, size = 0x12000, scoped, tag = 'internal scratch']
  %s0 = inlined_call_operand.vmem [shape: f32[2,16,512], index: 0, kind: input, shape index: {}]
  %s1 = inlined_call_operand.hbm [shape: f32[512,768], index: 1, kind: input, shape index: {}]
  %s2 = inlined_call_operand.hbm [shape: f32[384,128], index: 2, kind: input, shape index: {}]
  %s3 = inlined_call_operand.vmem [shape: f32[2,16,128], index: 3, kind: output, shape index: {}]
  %s4 = sld [smem:[#allocation0]]
  $region53: #{ast_feature.1} parent=0
    _
  %s6 = ssub.s32 1, %s4
  %s7 = scalar_select 0, %s6, %s4
  $region1: #{ast_feature.1} parent=0
    #allocation2 [shape = 'u8[1572864]{0}', space=vmem, size = 0x180000, scoped, tag = 'input window, operand 1, single buffered']
    #allocation3 [shape = 's32[2]{0}', space=sflag, size = 0x8, scoped, tag = 'scoped memory for ast_feature.1']
    #allocation4 [shape = 'u8[196608]{0}', space=vmem, size = 0x30000, scoped, tag = 'input window, operand 2, single buffered']
    #allocation5 [shape = 's32[1]{0}', space=sflag, size = 0x4, scoped, tag = 'scoped memory for ast_feature.1']
    %8 = vsyncpa [#allocation3], 0
    %9 = vsyncpa [#allocation5], 0
    loop: start=0, step=1, limit=4
    $region2: #{ast_feature.1} parent=1 // loop_pre_header
      _
    $region3: #{ast_feature.1} parent=1 // loop_header
      %s11 = sphi 0, %s15
      %p12 = scmp.ge.s32.totalorder %s11, 4
      %s18 = sphi 0, %s30
      %s19 = sphi 0, %s26
      %s20 = sphi 0, %s18
      %s21 = sphi 0, %s19
      %s22 = sphi 0, %s20
      %s23 = sphi 0, %s21
      %s35 = sphi 0, %s37
      %s38 = sphi 0, %s35
      %s39 = sphi 0, %s38
      %s55 = sphi 0, %s39
      %s59 = sphi 0, %s59
      %s61 = sphi 0, %s59
      %s62 = sphi 0, %s61
      %s76 = sphi 0, %s62
      %s80 = sphi 0, %s80
      %s82 = sphi 0, %s80
      %s83 = sphi 0, %s82
      %s97 = sphi 0, %s83
      %s105 = sphi 0, %s107
      %s108 = sphi 0, %s105
      %s109 = sphi 0, %s108
      %s125 = sphi 0, %s109
    $region4: #{ast_feature.1} parent=1 // loop_header_branch
      %14 = sbr.rel (%p12) target = $region8
    $region5: #{ast_feature.1} parent=1 // loop_body
      %s16 = ssub.s32 %s11, 1
      %s17 = ssub.s32 %s11, 2
      %s24 = sadd.s32 1, %s19
      %p25 = scmp.ge.s32.totalorder %s24, 1
      %s26 = scalar_select %p25, 0, %s24
      %s27 = sadd.s32 1, %s18
      %s28 = scalar_select %p25, %s27, %s18
      %p29 = scmp.ge.s32.totalorder %s28, 2
      %s30 = scalar_select %p29, 0, %s28
      %s31 = ssub.s32 %s18, %s30
      %s32 = ssub.s32 %s19, %s26
      %s33 = sor.u32 %s31, %s32
      %p34 = scmp.eq.s32.totalorder %s33, 0
      %s36 = sadd.s32 %s35, 1
      %s37 = scalar_select %p34, %s35, %s36
      %p40 = pneg %p34
      %p41 = scmp.eq.s32.totalorder %s11, 1
      %p42 = por %p40, %p41
      %p43 = scmp.ne.s32.totalorder %s35, %s38
      %p44 = scmp.eq.s32.totalorder %s11, 0
      %p45 = por %p43, %p44
      %p46 = scmp.ne.s32.totalorder %s35, %s38
      %p47 = scmp.eq.s32.totalorder %s16, 1
      %p48 = por %p46, %p47
      %p49 = scmp.ne.s32.totalorder %s38, %s39
      %p50 = scmp.eq.s32.totalorder %s16, 0
      %p51 = por %p49, %p50
      %p52 = scmp.ne.s32.totalorder %s38, %s39
      %p53 = scmp.eq.s32.totalorder %s17, 1
      %p54 = por %p52, %p53
      %p56 = scmp.ne.s32.totalorder %s39, %s55
      %p57 = scmp.eq.s32.totalorder %s17, 0
      %p58 = por %p56, %p57
      %s60 = sadd.s32 %s59, 1
      %p63 = scmp.eq.s32.totalorder %s11, 1
      %p64 = scmp.ne.s32.totalorder %s59, %s61
      %p65 = scmp.eq.s32.totalorder %s11, 0
      %p66 = por %p64, %p65
      %p67 = scmp.ne.s32.totalorder %s59, %s61
      %p68 = scmp.eq.s32.totalorder %s16, 1
      %p69 = por %p67, %p68
      %p70 = scmp.ne.s32.totalorder %s61, %s62
      %p71 = scmp.eq.s32.totalorder %s16, 0
      %p72 = por %p70, %p71
      %p73 = scmp.ne.s32.totalorder %s61, %s62
      %p74 = scmp.eq.s32.totalorder %s17, 1
      %p75 = por %p73, %p74
      %p77 = scmp.ne.s32.totalorder %s62, %s76
      %p78 = scmp.eq.s32.totalorder %s17, 0
      %p79 = por %p77, %p78
      %s81 = sadd.s32 %s80, 1
      %p84 = scmp.eq.s32.totalorder %s11, 1
      %p85 = scmp.ne.s32.totalorder %s80, %s82
      %p86 = scmp.eq.s32.totalorder %s11, 0
      %p87 = por %p85, %p86
      %p88 = scmp.ne.s32.totalorder %s80, %s82
      %p89 = scmp.eq.s32.totalorder %s16, 1
      %p90 = por %p88, %p89
      %p91 = scmp.ne.s32.totalorder %s82, %s83
      %p92 = scmp.eq.s32.totalorder %s16, 0
      %p93 = por %p91, %p92
      %p94 = scmp.ne.s32.totalorder %s82, %s83
      %p95 = scmp.eq.s32.totalorder %s17, 1
      %p96 = por %p94, %p95
      %p98 = scmp.ne.s32.totalorder %s83, %s97
      %p99 = scmp.eq.s32.totalorder %s17, 0
      %p100 = por %p98, %p99
      %s101 = ssub.s32 %s18, %s30
      %s102 = ssub.s32 %s19, %s26
      %s103 = sor.u32 %s101, %s102
      %p104 = scmp.eq.s32.totalorder %s103, 0
      %s106 = sadd.s32 %s105, 1
      %s107 = scalar_select %p104, %s105, %s106
      %p110 = pneg %p104
      %p111 = scmp.eq.s32.totalorder %s11, 1
      %p112 = por %p110, %p111
      %p113 = scmp.ne.s32.totalorder %s105, %s108
      %p114 = scmp.eq.s32.totalorder %s11, 0
      %p115 = por %p113, %p114
      %p116 = scmp.ne.s32.totalorder %s105, %s108
      %p117 = scmp.eq.s32.totalorder %s16, 1
      %p118 = por %p116, %p117
      %p119 = scmp.ne.s32.totalorder %s108, %s109
      %p120 = scmp.eq.s32.totalorder %s16, 0
      %p121 = por %p119, %p120
      %p122 = scmp.ne.s32.totalorder %s108, %s109
      %p123 = scmp.eq.s32.totalorder %s17, 1
      %p124 = por %p122, %p123
      %p126 = scmp.ne.s32.totalorder %s109, %s125
      %p127 = scmp.eq.s32.totalorder %s17, 0
      %p128 = por %p126, %p127
      %p129 = scmp.le.s32.totalorder 1, %s11
      %p130 = scmp.lt.s32.totalorder %s11, 3
      %p131 = pnand %p129, %p130
      %p132 = pneg %p131
      // Predicated region
      $region9: #{ast_feature.1} parent=5 // pred_check
        _
      $region10: #{ast_feature.1} parent=5 // pred_check_branch
        %134 = sbr.rel (%p131) target = $region12
      $region11: #{ast_feature.1} parent=5 // pred_region
        %s135 = ssub.s32 %s11, 1
        // Predicated region
        $region13: #{ast_feature.1} parent=11 // pred_check
          %p136 = pneg %p72
        $region14: #{ast_feature.1} parent=11 // pred_check_branch
          %138 = sbr.rel (%p136) target = $region16
        $region15: #{ast_feature.1} parent=11 // pred_region
          %s140 = ssub.s32 49152, 49152
          %141 = vsyncadd [#allocation3], %s140
          %s142 = sshll.u32 [#allocation2], 4
          %s143 = int_to_ptr.vmem [resolvable:$true] %s142
          %148 = dma.hbm_to_vmem [thread:$0]  %s1, 49152, %s143, [#allocation3], 768, 768, 48
        $region16: #{ast_feature.1} parent=11 // pred_fallthru
          _
        // Predicated region
        $region17: #{ast_feature.1} parent=11 // pred_check
          %p149 = pneg %p93
        $region18: #{ast_feature.1} parent=11 // pred_check_branch
          %151 = sbr.rel (%p149) target = $region20
        $region19: #{ast_feature.1} parent=11 // pred_region
          %s153 = ssub.s32 6144, 6144
          %154 = vsyncadd [#allocation5], %s153
          %s155 = sshll.u32 [#allocation4], 4
          %s156 = int_to_ptr.vmem [resolvable:$true] %s155
          %161 = dma.hbm_to_vmem [thread:$0]  %s2, 6144, %s156, [#allocation5], 128, 128, 8
        $region20: #{ast_feature.1} parent=11 // pred_fallthru
          _
      $region12: #{ast_feature.1} parent=5 // pred_fallthru
        _
      %p162 = scmp.lt.s32.totalorder %s11, 2
      // Predicated region
      $region21: #{ast_feature.1} parent=5 // pred_check
        %p163 = pneg %p162
      $region22: #{ast_feature.1} parent=5 // pred_check_branch
        %165 = sbr.rel (%p163) target = $region24
      $region23: #{ast_feature.1} parent=5 // pred_region
        // Predicated region
        $region25: #{ast_feature.1} parent=23 // pred_check
          %p166 = pneg %p45
        $region26: #{ast_feature.1} parent=23 // pred_check_branch
          %168 = sbr.rel (%p166) target = $region28
        $region27: #{ast_feature.1} parent=23 // pred_region
          %s169 = smul.u32 2, %s19
          %p170 = scmp.lt.s32.totalorder %s18, 1
          %s171 = scalar_select %p170, %s18, 1
          %p172 = scmp.lt.s32.totalorder %s169, 1
          %s173 = scalar_select %p172, %s169, 1
          %s174 = smul.addr %s173, 4
          %s175 = smul.addr %s171, 8
          %s176 = sadd.s32 %s174, %s175
          %s177 = smul.addr %s176, 8
          %s178 = scalar_lea.vmem %s0, %s177
          %s179 = smul.u32 2, %s19
        $region28: #{ast_feature.1} parent=23 // pred_fallthru
          _
      $region24: #{ast_feature.1} parent=5 // pred_fallthru
        _
      %p180 = scmp.le.s32.totalorder 1, %s11
      %p181 = scmp.lt.s32.totalorder %s11, 3
      %p182 = pnand %p180, %p181
      %p183 = pneg %p182
      // Predicated region
      $region29: #{ast_feature.1} parent=5 // pred_check
        _
      $region30: #{ast_feature.1} parent=5 // pred_check_branch
        %185 = sbr.rel (%p182) target = $region32
      $region31: #{ast_feature.1} parent=5 // pred_region
        %s186 = ssub.s32 %s11, 1
        // Predicated region
        $region33: #{ast_feature.1} parent=31 // pred_check
          %p187 = pneg %p72
        $region34: #{ast_feature.1} parent=31 // pred_check_branch
          %189 = sbr.rel (%p187) target = $region36
        $region35: #{ast_feature.1} parent=31 // pred_region
          %190 = dma.done [#allocation3], 49152
        $region36: #{ast_feature.1} parent=31 // pred_fallthru
          _
        // Predicated region
        $region37: #{ast_feature.1} parent=31 // pred_check
          %p191 = pneg %p93
        $region38: #{ast_feature.1} parent=31 // pred_check_branch
          %193 = sbr.rel (%p191) target = $region40
        $region39: #{ast_feature.1} parent=31 // pred_region
          %194 = dma.done [#allocation5], 6144
        $region40: #{ast_feature.1} parent=31 // pred_fallthru
          _
        %s195 = smul.u32 2, %s21
        %p196 = scmp.lt.s32.totalorder %s20, 1
        %s197 = scalar_select %p196, %s20, 1
        %p198 = scmp.lt.s32.totalorder %s195, 1
        %s199 = scalar_select %p198, %s195, 1
        %s200 = smul.addr %s199, 4
        %s201 = smul.addr %s197, 8
        %s202 = sadd.s32 %s200, %s201
        %s203 = smul.addr %s202, 8
        %s204 = scalar_lea.vmem %s0, %s203
        %p205 = pneg %p51
        %p206 = pneg %p48
        %p207 = pneg %p72
        %p208 = pneg %p69
        %p209 = pneg %p93
        %p210 = pneg %p90
        %p211 = pneg %p121
        %p212 = pneg %p118
        %s213 = smul.u32 2, %s21
        %p214 = scmp.lt.s32.totalorder %s20, 1
        %s215 = scalar_select %p214, %s20, 1
        %p216 = scmp.lt.s32.totalorder %s213, 1
        %s217 = scalar_select %p216, %s213, 1
        %s218 = smul.addr %s215, 2
        %s219 = sadd.s32 %s217, %s218
        %s220 = smul.addr %s219, 8
        %s221 = scalar_lea.vmem %s3, %s220
        %s222 = smul.u32 2, %s21
        %p223 = scmp.lt.s32.totalorder %s20, 1
        %s224 = scalar_select %p223, %s20, 1
        %p225 = scmp.lt.s32.totalorder %s222, 1
        %s226 = scalar_select %p225, %s222, 1
        %s227 = smul.addr %s226, 4
        %s228 = smul.addr %s224, 8
        %s229 = sadd.s32 %s227, %s228
        %s230 = smul.addr %s229, 8
        %s231 = scalar_lea.vmem %s0, %s230
        %s232 = smul.u32 2, %s21
        %s233 = smul.u32 2, %s21
        %p234 = scmp.lt.s32.totalorder %s20, 1
        %s235 = scalar_select %p234, %s20, 1
        %p236 = scmp.lt.s32.totalorder %s233, 1
        %s237 = scalar_select %p236, %s233, 1
        %s238 = smul.addr %s235, 2
        %s239 = sadd.s32 %s237, %s238
        %s240 = smul.addr %s239, 8
        %s241 = scalar_lea.vmem %s3, %s240
        %s242 = smul.u32 2, %s21
        %v243 = vld [vmem:[%s231] sm:$0xff]
        %v244 = vld [vmem:[%s231 + $0x8] sm:$0xff]
        %v245 = vld [vmem:[%s231 + $0x10] sm:$0xff]
        %v246 = vld [vmem:[%s231 + $0x18] sm:$0xff]
        %v247 = vld [vmem:[%s231 + $0x20] sm:$0xff]
        %v248 = vld [vmem:[%s231 + $0x28] sm:$0xff]
        %v249 = vld [vmem:[%s231 + $0x30] sm:$0xff]
        %v250 = vld [vmem:[%s231 + $0x38] sm:$0xff]
        %v251 = vld [vmem:[#allocation2] sm:$0xff]
        %v252 = vld [vmem:[#allocation2 + $0x8] sm:$0xff]
        %v253 = vld [vmem:[#allocation2 + $0x10] sm:$0xff]
        %v254 = vld [vmem:[#allocation2 + $0x18] sm:$0xff]
        %v255 = vld [vmem:[#allocation2 + $0x20] sm:$0xff]
        %v256 = vld [vmem:[#allocation2 + $0x28] sm:$0xff]
        %v257 = vld [vmem:[#allocation2 + $0x30] sm:$0xff]
        %v258 = vld [vmem:[#allocation2 + $0x38] sm:$0xff]
        %v259 = vld [vmem:[#allocation2 + $0x40] sm:$0xff]
        %v260 = vld [vmem:[#allocation2 + $0x48] sm:$0xff]
        %v261 = vld [vmem:[#allocation2 + $0x50] sm:$0xff]
        %v262 = vld [vmem:[#allocation2 + $0x58] sm:$0xff]
        %v263 = vld [vmem:[#allocation2 + $0x60] sm:$0xff]
        %v264 = vld [vmem:[#allocation2 + $0x68] sm:$0xff]
        %v265 = vld [vmem:[#allocation2 + $0x70] sm:$0xff]
        %v266 = vld [vmem:[#allocation2 + $0x78] sm:$0xff]
        %v267 = vld [vmem:[#allocation2 + $0x80] sm:$0xff]
        %v268 = vld [vmem:[#allocation2 + $0x88] sm:$0xff]
        %v269 = vld [vmem:[#allocation2 + $0x90] sm:$0xff]
        %v270 = vld [vmem:[#allocation2 + $0x98] sm:$0xff]
        %v271 = vld [vmem:[#allocation2 + $0xa0] sm:$0xff]
        %v272 = vld [vmem:[#allocation2 + $0xa8] sm:$0xff]
        %v273 = vld [vmem:[#allocation2 + $0xb0] sm:$0xff]
        %v274 = vld [vmem:[#allocation2 + $0xb8] sm:$0xff]
        %v275 = vld [vmem:[#allocation2 + $0xc0] sm:$0xff]
        %v276 = vld [vmem:[#allocation2 + $0xc8] sm:$0xff]
        %v277 = vld [vmem:[#allocation2 + $0xd0] sm:$0xff]
        %v278 = vld [vmem:[#allocation2 + $0xd8] sm:$0xff]
        %v279 = vld [vmem:[#allocation2 + $0xe0] sm:$0xff]
        %v280 = vld [vmem:[#allocation2 + $0xe8] sm:$0xff]
        %v281 = vld [vmem:[#allocation2 + $0xf0] sm:$0xff]
        %v282 = vld [vmem:[#allocation2 + $0xf8] sm:$0xff]
        %v283 = vld [vmem:[#allocation2 + $0x100] sm:$0xff]
        %v284 = vld [vmem:[#allocation2 + $0x108] sm:$0xff]
        %v285 = vld [vmem:[#allocation2 + $0x110] sm:$0xff]
        %v286 = vld [vmem:[#allocation2 + $0x118] sm:$0xff]
        %v287 = vld [vmem:[#allocation2 + $0x120] sm:$0xff]
        %v288 = vld [vmem:[#allocation2 + $0x128] sm:$0xff]
        %v289 = vld [vmem:[#allocation2 + $0x130] sm:$0xff]
        %v290 = vld [vmem:[#allocation2 + $0x138] sm:$0xff]
        %v291 = vld [vmem:[#allocation2 + $0x140] sm:$0xff]
        %v292 = vld [vmem:[#allocation2 + $0x148] sm:$0xff]
        %v293 = vld [vmem:[#allocation2 + $0x150] sm:$0xff]
        %v294 = vld [vmem:[#allocation2 + $0x158] sm:$0xff]
        %v295 = vld [vmem:[#allocation2 + $0x160] sm:$0xff]
        %v296 = vld [vmem:[#allocation2 + $0x168] sm:$0xff]
        %v297 = vld [vmem:[#allocation2 + $0x170] sm:$0xff]
        %v298 = vld [vmem:[#allocation2 + $0x178] sm:$0xff]
        %v299 = vld [vmem:[#allocation2 + $0x180] sm:$0xff]
        %v300 = vld [vmem:[#allocation2 + $0x188] sm:$0xff]
        %v301 = vld [vmem:[#allocation2 + $0x190] sm:$0xff]
        %v302 = vld [vmem:[#allocation2 + $0x198] sm:$0xff]
        %v303 = vld [vmem:[#allocation2 + $0x1a0] sm:$0xff]
        %v304 = vld [vmem:[#allocation2 + $0x1a8] sm:$0xff]
        %v305 = vld [vmem:[#allocation2 + $0x1b0] sm:$0xff]
        %v306 = vld [vmem:[#allocation2 + $0x1b8] sm:$0xff]
        %v307 = vld [vmem:[#allocation2 + $0x1c0] sm:$0xff]
        %v308 = vld [vmem:[#allocation2 + $0x1c8] sm:$0xff]
        %v309 = vld [vmem:[#allocation2 + $0x1d0] sm:$0xff]
        %v310 = vld [vmem:[#allocation2 + $0x1d8] sm:$0xff]
        %v311 = vld [vmem:[#allocation2 + $0x1e0] sm:$0xff]
        %v312 = vld [vmem:[#allocation2 + $0x1e8] sm:$0xff]
        %v313 = vld [vmem:[#allocation2 + $0x1f0] sm:$0xff]
        %v314 = vld [vmem:[#allocation2 + $0x1f8] sm:$0xff]
        %v315 = vld [vmem:[#allocation2 + $0x200] sm:$0xff]
        %v316 = vld [vmem:[#allocation2 + $0x208] sm:$0xff]
        %v317 = vld [vmem:[#allocation2 + $0x210] sm:$0xff]
        %v318 = vld [vmem:[#allocation2 + $0x218] sm:$0xff]
        %v319 = vld [vmem:[#allocation2 + $0x220] sm:$0xff]
        %v320 = vld [vmem:[#allocation2 + $0x228] sm:$0xff]
        %v321 = vld [vmem:[#allocation2 + $0x230] sm:$0xff]
        %v322 = vld [vmem:[#allocation2 + $0x238] sm:$0xff]
        %v323 = vld [vmem:[#allocation2 + $0x240] sm:$0xff]
        %v324 = vld [vmem:[#allocation2 + $0x248] sm:$0xff]
        %v325 = vld [vmem:[#allocation2 + $0x250] sm:$0xff]
        %v326 = vld [vmem:[#allocation2 + $0x258] sm:$0xff]
        %v327 = vld [vmem:[#allocation2 + $0x260] sm:$0xff]
        %v328 = vld [vmem:[#allocation2 + $0x268] sm:$0xff]
        %v329 = vld [vmem:[#allocation2 + $0x270] sm:$0xff]
        %v330 = vld [vmem:[#allocation2 + $0x278] sm:$0xff]
        %v331 = vld [vmem:[#allocation2 + $0x280] sm:$0xff]
        %v332 = vld [vmem:[#allocation2 + $0x288] sm:$0xff]
        %v333 = vld [vmem:[#allocation2 + $0x290] sm:$0xff]
        %v334 = vld [vmem:[#allocation2 + $0x298] sm:$0xff]
        %v335 = vld [vmem:[#allocation2 + $0x2a0] sm:$0xff]
        %v336 = vld [vmem:[#allocation2 + $0x2a8] sm:$0xff]
        %v337 = vld [vmem:[#allocation2 + $0x2b0] sm:$0xff]
        %v338 = vld [vmem:[#allocation2 + $0x2b8] sm:$0xff]
        %v339 = vld [vmem:[#allocation2 + $0x2c0] sm:$0xff]
        %v340 = vld [vmem:[#allocation2 + $0x2c8] sm:$0xff]
        %v341 = vld [vmem:[#allocation2 + $0x2d0] sm:$0xff]
        %v342 = vld [vmem:[#allocation2 + $0x2d8] sm:$0xff]
        %v343 = vld [vmem:[#allocation2 + $0x2e0] sm:$0xff]
        %v344 = vld [vmem:[#allocation2 + $0x2e8] sm:$0xff]
        %v345 = vld [vmem:[#allocation2 + $0x2f0] sm:$0xff]
        %v346 = vld [vmem:[#allocation2 + $0x2f8] sm:$0xff]
        %v347 = vld [vmem:[#allocation2 + $0x300] sm:$0xff]
        %v348 = vld [vmem:[#allocation2 + $0x308] sm:$0xff]
        %v349 = vld [vmem:[#allocation2 + $0x310] sm:$0xff]
        %v350 = vld [vmem:[#allocation2 + $0x318] sm:$0xff]
        %v351 = vld [vmem:[#allocation2 + $0x320] sm:$0xff]
        %v352 = vld [vmem:[#allocation2 + $0x328] sm:$0xff]
        %v353 = vld [vmem:[#allocation2 + $0x330] sm:$0xff]
        %v354 = vld [vmem:[#allocation2 + $0x338] sm:$0xff]
        %v355 = vld [vmem:[#allocation2 + $0x340] sm:$0xff]
        %v356 = vld [vmem:[#allocation2 + $0x348] sm:$0xff]
        %v357 = vld [vmem:[#allocation2 + $0x350] sm:$0xff]
        %v358 = vld [vmem:[#allocation2 + $0x358] sm:$0xff]
        %v359 = vld [vmem:[#allocation2 + $0x360] sm:$0xff]
        %v360 = vld [vmem:[#allocation2 + $0x368] sm:$0xff]
        %v361 = vld [vmem:[#allocation2 + $0x370] sm:$0xff]
        %v362 = vld [vmem:[#allocation2 + $0x378] sm:$0xff]
        %v363 = vld [vmem:[#allocation2 + $0x380] sm:$0xff]
        %v364 = vld [vmem:[#allocation2 + $0x388] sm:$0xff]
        %v365 = vld [vmem:[#allocation2 + $0x390] sm:$0xff]
        %v366 = vld [vmem:[#allocation2 + $0x398] sm:$0xff]
        %v367 = vld [vmem:[#allocation2 + $0x3a0] sm:$0xff]
        %v368 = vld [vmem:[#allocation2 + $0x3a8] sm:$0xff]
        %v369 = vld [vmem:[#allocation2 + $0x3b0] sm:$0xff]
        %v370 = vld [vmem:[#allocation2 + $0x3b8] sm:$0xff]
        %v371 = vld [vmem:[#allocation2 + $0x3c0] sm:$0xff]
        %v372 = vld [vmem:[#allocation2 + $0x3c8] sm:$0xff]
        %v373 = vld [vmem:[#allocation2 + $0x3d0] sm:$0xff]
        %v374 = vld [vmem:[#allocation2 + $0x3d8] sm:$0xff]
        %v375 = vld [vmem:[#allocation2 + $0x3e0] sm:$0xff]
        %v376 = vld [vmem:[#allocation2 + $0x3e8] sm:$0xff]
        %v377 = vld [vmem:[#allocation2 + $0x3f0] sm:$0xff]
        %v378 = vld [vmem:[#allocation2 + $0x3f8] sm:$0xff]
        %v379 = vld [vmem:[#allocation2 + $0x400] sm:$0xff]
        %v380 = vld [vmem:[#allocation2 + $0x408] sm:$0xff]
        %v381 = vld [vmem:[#allocation2 + $0x410] sm:$0xff]
        %v382 = vld [vmem:[#allocation2 + $0x418] sm:$0xff]
        %v383 = vld [vmem:[#allocation2 + $0x420] sm:$0xff]
        %v384 = vld [vmem:[#allocation2 + $0x428] sm:$0xff]
        %v385 = vld [vmem:[#allocation2 + $0x430] sm:$0xff]
        %v386 = vld [vmem:[#allocation2 + $0x438] sm:$0xff]
        %v387 = vld [vmem:[#allocation2 + $0x440] sm:$0xff]
        %v388 = vld [vmem:[#allocation2 + $0x448] sm:$0xff]
        %v389 = vld [vmem:[#allocation2 + $0x450] sm:$0xff]
        %v390 = vld [vmem:[#allocation2 + $0x458] sm:$0xff]
        %v391 = vld [vmem:[#allocation2 + $0x460] sm:$0xff]
        %v392 = vld [vmem:[#allocation2 + $0x468] sm:$0xff]
        %v393 = vld [vmem:[#allocation2 + $0x470] sm:$0xff]
        %v394 = vld [vmem:[#allocation2 + $0x478] sm:$0xff]
        %v395 = vld [vmem:[#allocation2 + $0x480] sm:$0xff]
        %v396 = vld [vmem:[#allocation2 + $0x488] sm:$0xff]
        %v397 = vld [vmem:[#allocation2 + $0x490] sm:$0xff]
        %v398 = vld [vmem:[#allocation2 + $0x498] sm:$0xff]
        %v399 = vld [vmem:[#allocation2 + $0x4a0] sm:$0xff]
        %v400 = vld [vmem:[#allocation2 + $0x4a8] sm:$0xff]
        %v401 = vld [vmem:[#allocation2 + $0x4b0] sm:$0xff]
        %v402 = vld [vmem:[#allocation2 + $0x4b8] sm:$0xff]
        %v403 = vld [vmem:[#allocation2 + $0x4c0] sm:$0xff]
        %v404 = vld [vmem:[#allocation2 + $0x4c8] sm:$0xff]
        %v405 = vld [vmem:[#allocation2 + $0x4d0] sm:$0xff]
        %v406 = vld [vmem:[#allocation2 + $0x4d8] sm:$0xff]
        %v407 = vld [vmem:[#allocation2 + $0x4e0] sm:$0xff]
        %v408 = vld [vmem:[#allocation2 + $0x4e8] sm:$0xff]
        %v409 = vld [vmem:[#allocation2 + $0x4f0] sm:$0xff]
        %v410 = vld [vmem:[#allocation2 + $0x4f8] sm:$0xff]
        %v411 = vld [vmem:[#allocation2 + $0x500] sm:$0xff]
        %v412 = vld [vmem:[#allocation2 + $0x508] sm:$0xff]
        %v413 = vld [vmem:[#allocation2 + $0x510] sm:$0xff]
        %v414 = vld [vmem:[#allocation2 + $0x518] sm:$0xff]
        %v415 = vld [vmem:[#allocation2 + $0x520] sm:$0xff]
        %v416 = vld [vmem:[#allocation2 + $0x528] sm:$0xff]
        %v417 = vld [vmem:[#allocation2 + $0x530] sm:$0xff]
        %v418 = vld [vmem:[#allocation2 + $0x538] sm:$0xff]
        %v419 = vld [vmem:[#allocation2 + $0x540] sm:$0xff]
        %v420 = vld [vmem:[#allocation2 + $0x548] sm:$0xff]
        %v421 = vld [vmem:[#allocation2 + $0x550] sm:$0xff]
        %v422 = vld [vmem:[#allocation2 + $0x558] sm:$0xff]
        %v423 = vld [vmem:[#allocation2 + $0x560] sm:$0xff]
        %v424 = vld [vmem:[#allocation2 + $0x568] sm:$0xff]
        %v425 = vld [vmem:[#allocation2 + $0x570] sm:$0xff]
        %v426 = vld [vmem:[#allocation2 + $0x578] sm:$0xff]
        %v427 = vld [vmem:[#allocation2 + $0x580] sm:$0xff]
        %v428 = vld [vmem:[#allocation2 + $0x588] sm:$0xff]
        %v429 = vld [vmem:[#allocation2 + $0x590] sm:$0xff]
        %v430 = vld [vmem:[#allocation2 + $0x598] sm:$0xff]
        %v431 = vld [vmem:[#allocation2 + $0x5a0] sm:$0xff]
        %v432 = vld [vmem:[#allocation2 + $0x5a8] sm:$0xff]
        %v433 = vld [vmem:[#allocation2 + $0x5b0] sm:$0xff]
        %v434 = vld [vmem:[#allocation2 + $0x5b8] sm:$0xff]
        %v435 = vld [vmem:[#allocation2 + $0x5c0] sm:$0xff]
        %v436 = vld [vmem:[#allocation2 + $0x5c8] sm:$0xff]
        %v437 = vld [vmem:[#allocation2 + $0x5d0] sm:$0xff]
        %v438 = vld [vmem:[#allocation2 + $0x5d8] sm:$0xff]
        %v439 = vld [vmem:[#allocation2 + $0x5e0] sm:$0xff]
        %v440 = vld [vmem:[#allocation2 + $0x5e8] sm:$0xff]
        %v441 = vld [vmem:[#allocation2 + $0x5f0] sm:$0xff]
        %v442 = vld [vmem:[#allocation2 + $0x5f8] sm:$0xff]
        %v443 = vld [vmem:[#allocation2 + $0x600] sm:$0xff]
        %v444 = vld [vmem:[#allocation2 + $0x608] sm:$0xff]
        %v445 = vld [vmem:[#allocation2 + $0x610] sm:$0xff]
        %v446 = vld [vmem:[#allocation2 + $0x618] sm:$0xff]
        %v447 = vld [vmem:[#allocation2 + $0x620] sm:$0xff]
        %v448 = vld [vmem:[#allocation2 + $0x628] sm:$0xff]
        %v449 = vld [vmem:[#allocation2 + $0x630] sm:$0xff]
        %v450 = vld [vmem:[#allocation2 + $0x638] sm:$0xff]
        %v451 = vld [vmem:[#allocation2 + $0x640] sm:$0xff]
        %v452 = vld [vmem:[#allocation2 + $0x648] sm:$0xff]
        %v453 = vld [vmem:[#allocation2 + $0x650] sm:$0xff]
        %v454 = vld [vmem:[#allocation2 + $0x658] sm:$0xff]
        %v455 = vld [vmem:[#allocation2 + $0x660] sm:$0xff]
        %v456 = vld [vmem:[#allocation2 + $0x668] sm:$0xff]
        %v457 = vld [vmem:[#allocation2 + $0x670] sm:$0xff]
        %v458 = vld [vmem:[#allocation2 + $0x678] sm:$0xff]
        %v459 = vld [vmem:[#allocation2 + $0x680] sm:$0xff]
        %v460 = vld [vmem:[#allocation2 + $0x688] sm:$0xff]
        %v461 = vld [vmem:[#allocation2 + $0x690] sm:$0xff]
        %v462 = vld [vmem:[#allocation2 + $0x698] sm:$0xff]
        %v463 = vld [vmem:[#allocation2 + $0x6a0] sm:$0xff]
        %v464 = vld [vmem:[#allocation2 + $0x6a8] sm:$0xff]
        %v465 = vld [vmem:[#allocation2 + $0x6b0] sm:$0xff]
        %v466 = vld [vmem:[#allocation2 + $0x6b8] sm:$0xff]
        %v467 = vld [vmem:[#allocation2 + $0x6c0] sm:$0xff]
        %v468 = vld [vmem:[#allocation2 + $0x6c8] sm:$0xff]
        %v469 = vld [vmem:[#allocation2 + $0x6d0] sm:$0xff]
        %v470 = vld [vmem:[#allocation2 + $0x6d8] sm:$0xff]
        %v471 = vld [vmem:[#allocation2 + $0x6e0] sm:$0xff]
        %v472 = vld [vmem:[#allocation2 + $0x6e8] sm:$0xff]
        %v473 = vld [vmem:[#allocation2 + $0x6f0] sm:$0xff]
        %v474 = vld [vmem:[#allocation2 + $0x6f8] sm:$0xff]
        %v475 = vld [vmem:[#allocation2 + $0x700] sm:$0xff]
        %v476 = vld [vmem:[#allocation2 + $0x708] sm:$0xff]
        %v477 = vld [vmem:[#allocation2 + $0x710] sm:$0xff]
        %v478 = vld [vmem:[#allocation2 + $0x718] sm:$0xff]
        %v479 = vld [vmem:[#allocation2 + $0x720] sm:$0xff]
        %v480 = vld [vmem:[#allocation2 + $0x728] sm:$0xff]
        %v481 = vld [vmem:[#allocation2 + $0x730] sm:$0xff]
        %v482 = vld [vmem:[#allocation2 + $0x738] sm:$0xff]
        %v483 = vld [vmem:[#allocation2 + $0x740] sm:$0xff]
        %v484 = vld [vmem:[#allocation2 + $0x748] sm:$0xff]
        %v485 = vld [vmem:[#allocation2 + $0x750] sm:$0xff]
        %v486 = vld [vmem:[#allocation2 + $0x758] sm:$0xff]
        %v487 = vld [vmem:[#allocation2 + $0x760] sm:$0xff]
        %v488 = vld [vmem:[#allocation2 + $0x768] sm:$0xff]
        %v489 = vld [vmem:[#allocation2 + $0x770] sm:$0xff]
        %v490 = vld [vmem:[#allocation2 + $0x778] sm:$0xff]
        %v491 = vld [vmem:[#allocation2 + $0x780] sm:$0xff]
        %v492 = vld [vmem:[#allocation2 + $0x788] sm:$0xff]
        %v493 = vld [vmem:[#allocation2 + $0x790] sm:$0xff]
        %v494 = vld [vmem:[#allocation2 + $0x798] sm:$0xff]
        %v495 = vld [vmem:[#allocation2 + $0x7a0] sm:$0xff]
        %v496 = vld [vmem:[#allocation2 + $0x7a8] sm:$0xff]
        %v497 = vld [vmem:[#allocation2 + $0x7b0] sm:$0xff]
        %v498 = vld [vmem:[#allocation2 + $0x7b8] sm:$0xff]
        %v499 = vld [vmem:[#allocation2 + $0x7c0] sm:$0xff]
        %v500 = vld [vmem:[#allocation2 + $0x7c8] sm:$0xff]
        %v501 = vld [vmem:[#allocation2 + $0x7d0] sm:$0xff]
        %v502 = vld [vmem:[#allocation2 + $0x7d8] sm:$0xff]
        %v503 = vld [vmem:[#allocation2 + $0x7e0] sm:$0xff]
        %v504 = vld [vmem:[#allocation2 + $0x7e8] sm:$0xff]
        %v505 = vld [vmem:[#allocation2 + $0x7f0] sm:$0xff]
        %v506 = vld [vmem:[#allocation2 + $0x7f8] sm:$0xff]
        %v507 = vld [vmem:[#allocation2 + $0x800] sm:$0xff]
        %v508 = vld [vmem:[#allocation2 + $0x808] sm:$0xff]
        %v509 = vld [vmem:[#allocation2 + $0x810] sm:$0xff]
        %v510 = vld [vmem:[#allocation2 + $0x818] sm:$0xff]
        %v511 = vld [vmem:[#allocation2 + $0x820] sm:$0xff]
        %v512 = vld [vmem:[#allocation2 + $0x828] sm:$0xff]
        %v513 = vld [vmem:[#allocation2 + $0x830] sm:$0xff]
        %v514 = vld [vmem:[#allocation2 + $0x838] sm:$0xff]
        %v515 = vld [vmem:[#allocation2 + $0x840] sm:$0xff]
        %v516 = vld [vmem:[#allocation2 + $0x848] sm:$0xff]
        %v517 = vld [vmem:[#allocation2 + $0x850] sm:$0xff]
        %v518 = vld [vmem:[#allocation2 + $0x858] sm:$0xff]
        %v519 = vld [vmem:[#allocation2 + $0x860] sm:$0xff]
        %v520 = vld [vmem:[#allocation2 + $0x868] sm:$0xff]
        %v521 = vld [vmem:[#allocation2 + $0x870] sm:$0xff]
        %v522 = vld [vmem:[#allocation2 + $0x878] sm:$0xff]
        %v523 = vld [vmem:[#allocation2 + $0x880] sm:$0xff]
        %v524 = vld [vmem:[#allocation2 + $0x888] sm:$0xff]
        %v525 = vld [vmem:[#allocation2 + $0x890] sm:$0xff]
        %v526 = vld [vmem:[#allocation2 + $0x898] sm:$0xff]
        %v527 = vld [vmem:[#allocation2 + $0x8a0] sm:$0xff]
        %v528 = vld [vmem:[#allocation2 + $0x8a8] sm:$0xff]
        %v529 = vld [vmem:[#allocation2 + $0x8b0] sm:$0xff]
        %v530 = vld [vmem:[#allocation2 + $0x8b8] sm:$0xff]
        %v531 = vld [vmem:[#allocation2 + $0x8c0] sm:$0xff]
        %v532 = vld [vmem:[#allocation2 + $0x8c8] sm:$0xff]
        %v533 = vld [vmem:[#allocation2 + $0x8d0] sm:$0xff]
        %v534 = vld [vmem:[#allocation2 + $0x8d8] sm:$0xff]
        %v535 = vld [vmem:[#allocation2 + $0x8e0] sm:$0xff]
        %v536 = vld [vmem:[#allocation2 + $0x8e8] sm:$0xff]
        %v537 = vld [vmem:[#allocation2 + $0x8f0] sm:$0xff]
        %v538 = vld [vmem:[#allocation2 + $0x8f8] sm:$0xff]
        %v539 = vld [vmem:[#allocation2 + $0x900] sm:$0xff]
        %v540 = vld [vmem:[#allocation2 + $0x908] sm:$0xff]
        %v541 = vld [vmem:[#allocation2 + $0x910] sm:$0xff]
        %v542 = vld [vmem:[#allocation2 + $0x918] sm:$0xff]
        %v543 = vld [vmem:[#allocation2 + $0x920] sm:$0xff]
        %v544 = vld [vmem:[#allocation2 + $0x928] sm:$0xff]
        %v545 = vld [vmem:[#allocation2 + $0x930] sm:$0xff]
        %v546 = vld [vmem:[#allocation2 + $0x938] sm:$0xff]
        %v547 = vld [vmem:[#allocation2 + $0x940] sm:$0xff]
        %v548 = vld [vmem:[#allocation2 + $0x948] sm:$0xff]
        %v549 = vld [vmem:[#allocation2 + $0x950] sm:$0xff]
        %v550 = vld [vmem:[#allocation2 + $0x958] sm:$0xff]
        %v551 = vld [vmem:[#allocation2 + $0x960] sm:$0xff]
        %v552 = vld [vmem:[#allocation2 + $0x968] sm:$0xff]
        %v553 = vld [vmem:[#allocation2 + $0x970] sm:$0xff]
        %v554 = vld [vmem:[#allocation2 + $0x978] sm:$0xff]
        %v555 = vld [vmem:[#allocation2 + $0x980] sm:$0xff]
        %v556 = vld [vmem:[#allocation2 + $0x988] sm:$0xff]
        %v557 = vld [vmem:[#allocation2 + $0x990] sm:$0xff]
        %v558 = vld [vmem:[#allocation2 + $0x998] sm:$0xff]
        %v559 = vld [vmem:[#allocation2 + $0x9a0] sm:$0xff]
        %v560 = vld [vmem:[#allocation2 + $0x9a8] sm:$0xff]
        %v561 = vld [vmem:[#allocation2 + $0x9b0] sm:$0xff]
        %v562 = vld [vmem:[#allocation2 + $0x9b8] sm:$0xff]
        %v563 = vld [vmem:[#allocation2 + $0x9c0] sm:$0xff]
        %v564 = vld [vmem:[#allocation2 + $0x9c8] sm:$0xff]
        %v565 = vld [vmem:[#allocation2 + $0x9d0] sm:$0xff]
        %v566 = vld [vmem:[#allocation2 + $0x9d8] sm:$0xff]
        %v567 = vld [vmem:[#allocation2 + $0x9e0] sm:$0xff]
        %v568 = vld [vmem:[#allocation2 + $0x9e8] sm:$0xff]
        %v569 = vld [vmem:[#allocation2 + $0x9f0] sm:$0xff]
        %v570 = vld [vmem:[#allocation2 + $0x9f8] sm:$0xff]
        %v571 = vld [vmem:[#allocation2 + $0xa00] sm:$0xff]
        %v572 = vld [vmem:[#allocation2 + $0xa08] sm:$0xff]
        %v573 = vld [vmem:[#allocation2 + $0xa10] sm:$0xff]
        %v574 = vld [vmem:[#allocation2 + $0xa18] sm:$0xff]
        %v575 = vld [vmem:[#allocation2 + $0xa20] sm:$0xff]
        %v576 = vld [vmem:[#allocation2 + $0xa28] sm:$0xff]
        %v577 = vld [vmem:[#allocation2 + $0xa30] sm:$0xff]
        %v578 = vld [vmem:[#allocation2 + $0xa38] sm:$0xff]
        %v579 = vld [vmem:[#allocation2 + $0xa40] sm:$0xff]
        %v580 = vld [vmem:[#allocation2 + $0xa48] sm:$0xff]
        %v581 = vld [vmem:[#allocation2 + $0xa50] sm:$0xff]
        %v582 = vld [vmem:[#allocation2 + $0xa58] sm:$0xff]
        %v583 = vld [vmem:[#allocation2 + $0xa60] sm:$0xff]
        %v584 = vld [vmem:[#allocation2 + $0xa68] sm:$0xff]
        %v585 = vld [vmem:[#allocation2 + $0xa70] sm:$0xff]
        %v586 = vld [vmem:[#allocation2 + $0xa78] sm:$0xff]
        %v587 = vld [vmem:[#allocation2 + $0xa80] sm:$0xff]
        %v588 = vld [vmem:[#allocation2 + $0xa88] sm:$0xff]
        %v589 = vld [vmem:[#allocation2 + $0xa90] sm:$0xff]
        %v590 = vld [vmem:[#allocation2 + $0xa98] sm:$0xff]
        %v591 = vld [vmem:[#allocation2 + $0xaa0] sm:$0xff]
        %v592 = vld [vmem:[#allocation2 + $0xaa8] sm:$0xff]
        %v593 = vld [vmem:[#allocation2 + $0xab0] sm:$0xff]
        %v594 = vld [vmem:[#allocation2 + $0xab8] sm:$0xff]
        %v595 = vld [vmem:[#allocation2 + $0xac0] sm:$0xff]
        %v596 = vld [vmem:[#allocation2 + $0xac8] sm:$0xff]
        %v597 = vld [vmem:[#allocation2 + $0xad0] sm:$0xff]
        %v598 = vld [vmem:[#allocation2 + $0xad8] sm:$0xff]
        %v599 = vld [vmem:[#allocation2 + $0xae0] sm:$0xff]
        %v600 = vld [vmem:[#allocation2 + $0xae8] sm:$0xff]
        %v601 = vld [vmem:[#allocation2 + $0xaf0] sm:$0xff]
        %v602 = vld [vmem:[#allocation2 + $0xaf8] sm:$0xff]
        %v603 = vld [vmem:[#allocation2 + $0xb00] sm:$0xff]
        %v604 = vld [vmem:[#allocation2 + $0xb08] sm:$0xff]
        %v605 = vld [vmem:[#allocation2 + $0xb10] sm:$0xff]
        %v606 = vld [vmem:[#allocation2 + $0xb18] sm:$0xff]
        %v607 = vld [vmem:[#allocation2 + $0xb20] sm:$0xff]
        %v608 = vld [vmem:[#allocation2 + $0xb28] sm:$0xff]
        %v609 = vld [vmem:[#allocation2 + $0xb30] sm:$0xff]
        %v610 = vld [vmem:[#allocation2 + $0xb38] sm:$0xff]
        %v611 = vld [vmem:[#allocation2 + $0xb40] sm:$0xff]
        %v612 = vld [vmem:[#allocation2 + $0xb48] sm:$0xff]
        %v613 = vld [vmem:[#allocation2 + $0xb50] sm:$0xff]
        %v614 = vld [vmem:[#allocation2 + $0xb58] sm:$0xff]
        %v615 = vld [vmem:[#allocation2 + $0xb60] sm:$0xff]
        %v616 = vld [vmem:[#allocation2 + $0xb68] sm:$0xff]
        %v617 = vld [vmem:[#allocation2 + $0xb70] sm:$0xff]
        %v618 = vld [vmem:[#allocation2 + $0xb78] sm:$0xff]
        %v619 = vld [vmem:[#allocation2 + $0xb80] sm:$0xff]
        %v620 = vld [vmem:[#allocation2 + $0xb88] sm:$0xff]
        %v621 = vld [vmem:[#allocation2 + $0xb90] sm:$0xff]
        %v622 = vld [vmem:[#allocation2 + $0xb98] sm:$0xff]
        %v623 = vld [vmem:[#allocation2 + $0xba0] sm:$0xff]
        %v624 = vld [vmem:[#allocation2 + $0xba8] sm:$0xff]
        %v625 = vld [vmem:[#allocation2 + $0xbb0] sm:$0xff]
        %v626 = vld [vmem:[#allocation2 + $0xbb8] sm:$0xff]
        %v627 = vld [vmem:[#allocation2 + $0xbc0] sm:$0xff]
        %v628 = vld [vmem:[#allocation2 + $0xbc8] sm:$0xff]
        %v629 = vld [vmem:[#allocation2 + $0xbd0] sm:$0xff]
        %v630 = vld [vmem:[#allocation2 + $0xbd8] sm:$0xff]
        %v631 = vld [vmem:[#allocation2 + $0xbe0] sm:$0xff]
        %v632 = vld [vmem:[#allocation2 + $0xbe8] sm:$0xff]
        %v633 = vld [vmem:[#allocation2 + $0xbf0] sm:$0xff]
        %v634 = vld [vmem:[#allocation2 + $0xbf8] sm:$0xff]
        %635 = vmatprep.subr.mxu0 %v252
        %636 = vmatpush1.msra.mxu0 %v251
        %637 = vmatprep.subr.mxu0 %v258
        %638 = vmatpush1.msra.mxu0 %v257
        %639 = vmatprep.subr.mxu0 %v264
        %640 = vmatpush1.msra.mxu0 %v263
        %641 = vmatprep.subr.mxu0 %v270
        %642 = vmatpush1.msra.mxu0 %v269
        %643 = vmatprep.subr.mxu0 %v276
        %644 = vmatpush1.msra.mxu0 %v275
        %645 = vmatprep.subr.mxu0 %v282
        %646 = vmatpush1.msra.mxu0 %v281
        %647 = vmatprep.subr.mxu0 %v288
        %648 = vmatpush1.msra.mxu0 %v287
        %649 = vmatprep.subr.mxu0 %v294
        %650 = vmatpush1.msra.mxu0 %v293
        %651 = vmatprep.subr.mxu0 %v300
        %652 = vmatpush1.msra.mxu0 %v299
        %653 = vmatprep.subr.mxu0 %v306
        %654 = vmatpush1.msra.mxu0 %v305
        %655 = vmatprep.subr.mxu0 %v312
        %656 = vmatpush1.msra.mxu0 %v311
        %657 = vmatprep.subr.mxu0 %v318
        %658 = vmatpush1.msra.mxu0 %v317
        %659 = vmatprep.subr.mxu0 %v324
        %660 = vmatpush1.msra.mxu0 %v323
        %661 = vmatprep.subr.mxu0 %v330
        %662 = vmatpush1.msra.mxu0 %v329
        %663 = vmatprep.subr.mxu0 %v336
        %664 = vmatpush1.msra.mxu0 %v335
        %665 = vmatprep.subr.mxu0 %v342
        %666 = vmatpush1.msra.mxu0 %v341
        %667 = vmatprep.subr.mxu0 %v348
        %668 = vmatpush1.msra.mxu0 %v347
        %669 = vmatprep.subr.mxu0 %v354
        %670 = vmatpush1.msra.mxu0 %v353
        %671 = vmatprep.subr.mxu0 %v360
        %672 = vmatpush1.msra.mxu0 %v359
        %673 = vmatprep.subr.mxu0 %v366
        %674 = vmatpush1.msra.mxu0 %v365
        %675 = vmatprep.subr.mxu0 %v372
        %676 = vmatpush1.msra.mxu0 %v371
        %677 = vmatprep.subr.mxu0 %v378
        %678 = vmatpush1.msra.mxu0 %v377
        %679 = vmatprep.subr.mxu0 %v384
        %680 = vmatpush1.msra.mxu0 %v383
        %681 = vmatprep.subr.mxu0 %v390
        %682 = vmatpush1.msra.mxu0 %v389
        %683 = vmatprep.subr.mxu0 %v396
        %684 = vmatpush1.msra.mxu0 %v395
        %685 = vmatprep.subr.mxu0 %v402
        %686 = vmatpush1.msra.mxu0 %v401
        %687 = vmatprep.subr.mxu0 %v408
        %688 = vmatpush1.msra.mxu0 %v407
        %689 = vmatprep.subr.mxu0 %v414
        %690 = vmatpush1.msra.mxu0 %v413
        %691 = vmatprep.subr.mxu0 %v420
        %692 = vmatpush1.msra.mxu0 %v419
        %693 = vmatprep.subr.mxu0 %v426
        %694 = vmatpush1.msra.mxu0 %v425
        %695 = vmatprep.subr.mxu0 %v432
        %696 = vmatpush1.msra.mxu0 %v431
        %697 = vmatprep.subr.mxu0 %v438
        %698 = vmatpush1.msra.mxu0 %v437
        %699 = vmatprep.mubr.f32.mxu0 %v244
        %700 = vmatmul.mubr.f32.gmra.mrb[0].mxu0 %v243
        %v701 = vpop.f32.mrb[0].mxu0
        %v702 = vadd.f32 0.0, %v701
        %v703 = vpop.f32.mrb[0].mxu0
        %v704 = vadd.f32 0.0, %v703
        %705 = vmatprep.mubr.f32.mxu0 %v248
        %706 = vmatmul.mubr.f32.gmra.mrb[0].mxu0 %v247
        %v707 = vpop.f32.mrb[0].mxu0
        %v708 = vadd.f32 0.0, %v707
        %v709 = vpop.f32.mrb[0].mxu0
        %v710 = vadd.f32 0.0, %v709
        %711 = vdwg.mxu0
        %712 = vmatprep.subr.mxu0 %v444
        %713 = vmatpush1.msra.mxu0 %v443
        %714 = vmatprep.subr.mxu0 %v450
        %715 = vmatpush1.msra.mxu0 %v449
        %716 = vmatprep.subr.mxu0 %v456
        %717 = vmatpush1.msra.mxu0 %v455
        %718 = vmatprep.subr.mxu0 %v462
        %719 = vmatpush1.msra.mxu0 %v461
        %720 = vmatprep.subr.mxu0 %v468
        %721 = vmatpush1.msra.mxu0 %v467
        %722 = vmatprep.subr.mxu0 %v474
        %723 = vmatpush1.msra.mxu0 %v473
        %724 = vmatprep.subr.mxu0 %v480
        %725 = vmatpush1.msra.mxu0 %v479
        %726 = vmatprep.subr.mxu0 %v486
        %727 = vmatpush1.msra.mxu0 %v485
        %728 = vmatprep.subr.mxu0 %v492
        %729 = vmatpush1.msra.mxu0 %v491
        %730 = vmatprep.subr.mxu0 %v498
        %731 = vmatpush1.msra.mxu0 %v497
        %732 = vmatprep.subr.mxu0 %v504
        %733 = vmatpush1.msra.mxu0 %v503
        %734 = vmatprep.subr.mxu0 %v510
        %735 = vmatpush1.msra.mxu0 %v509
        %736 = vmatprep.subr.mxu0 %v516
        %737 = vmatpush1.msra.mxu0 %v515
        %738 = vmatprep.subr.mxu0 %v522
        %739 = vmatpush1.msra.mxu0 %v521
        %740 = vmatprep.subr.mxu0 %v528
        %741 = vmatpush1.msra.mxu0 %v527
        %742 = vmatprep.subr.mxu0 %v534
        %743 = vmatpush1.msra.mxu0 %v533
        %744 = vmatprep.subr.mxu0 %v540
        %745 = vmatpush1.msra.mxu0 %v539
        %746 = vmatprep.subr.mxu0 %v546
        %747 = vmatpush1.msra.mxu0 %v545
        %748 = vmatprep.subr.mxu0 %v552
        %749 = vmatpush1.msra.mxu0 %v551
        %750 = vmatprep.subr.mxu0 %v558
        %751 = vmatpush1.msra.mxu0 %v557
        %752 = vmatprep.subr.mxu0 %v564
        %753 = vmatpush1.msra.mxu0 %v563
        %754 = vmatprep.subr.mxu0 %v570
        %755 = vmatpush1.msra.mxu0 %v569
        %756 = vmatprep.subr.mxu0 %v576
        %757 = vmatpush1.msra.mxu0 %v575
        %758 = vmatprep.subr.mxu0 %v582
        %759 = vmatpush1.msra.mxu0 %v581
        %760 = vmatprep.subr.mxu0 %v588
        %761 = vmatpush1.msra.mxu0 %v587
        %762 = vmatprep.subr.mxu0 %v594
        %763 = vmatpush1.msra.mxu0 %v593
        %764 = vmatprep.subr.mxu0 %v600
        %765 = vmatpush1.msra.mxu0 %v599
        %766 = vmatprep.subr.mxu0 %v606
        %767 = vmatpush1.msra.mxu0 %v605
        %768 = vmatprep.subr.mxu0 %v612
        %769 = vmatpush1.msra.mxu0 %v611
        %770 = vmatprep.subr.mxu0 %v618
        %771 = vmatpush1.msra.mxu0 %v617
        %772 = vmatprep.subr.mxu0 %v624
        %773 = vmatpush1.msra.mxu0 %v623
        %774 = vmatprep.subr.mxu0 %v630
        %775 = vmatpush1.msra.mxu0 %v629
        %776 = vmatprep.mubr.f32.mxu0 %v246
        %777 = vmatmul.mubr.f32.gmra.mrb[0].mxu0 %v245
        %v778 = vpop.f32.mrb[0].mxu0
        %v779 = vadd.f32 %v702, %v778
        %v780 = vpop.f32.mrb[0].mxu0
        %v781 = vadd.f32 %v704, %v780
        %782 = vmatprep.mubr.f32.mxu0 %v250
        %783 = vmatmul.mubr.f32.gmra.mrb[0].mxu0 %v249
        %v784 = vpop.f32.mrb[0].mxu0
        %v785 = vadd.f32 %v708, %v784
        %v786 = vpop.f32.mrb[0].mxu0
        %v787 = vadd.f32 %v710, %v786
        %788 = vdwg.mxu0
        %789 = vmatprep.subr.mxu0 %v254
        %790 = vmatpush1.msra.mxu0 %v253
        %791 = vmatprep.subr.mxu0 %v260
        %792 = vmatpush1.msra.mxu0 %v259
        %793 = vmatprep.subr.mxu0 %v266
        %794 = vmatpush1.msra.mxu0 %v265
        %795 = vmatprep.subr.mxu0 %v272
        %796 = vmatpush1.msra.mxu0 %v271
        %797 = vmatprep.subr.mxu0 %v278
        %798 = vmatpush1.msra.mxu0 %v277
        %799 = vmatprep.subr.mxu0 %v284
        %800 = vmatpush1.msra.mxu0 %v283
        %801 = vmatprep.subr.mxu0 %v290
        %802 = vmatpush1.msra.mxu0 %v289
        %803 = vmatprep.subr.mxu0 %v296
        %804 = vmatpush1.msra.mxu0 %v295
        %805 = vmatprep.subr.mxu0 %v302
        %806 = vmatpush1.msra.mxu0 %v301
        %807 = vmatprep.subr.mxu0 %v308
        %808 = vmatpush1.msra.mxu0 %v307
        %809 = vmatprep.subr.mxu0 %v314
        %810 = vmatpush1.msra.mxu0 %v313
        %811 = vmatprep.subr.mxu0 %v320
        %812 = vmatpush1.msra.mxu0 %v319
        %813 = vmatprep.subr.mxu0 %v326
        %814 = vmatpush1.msra.mxu0 %v325
        %815 = vmatprep.subr.mxu0 %v332
        %816 = vmatpush1.msra.mxu0 %v331
        %817 = vmatprep.subr.mxu0 %v338
        %818 = vmatpush1.msra.mxu0 %v337
        %819 = vmatprep.subr.mxu0 %v344
        %820 = vmatpush1.msra.mxu0 %v343
        %821 = vmatprep.subr.mxu0 %v350
        %822 = vmatpush1.msra.mxu0 %v349
        %823 = vmatprep.subr.mxu0 %v356
        %824 = vmatpush1.msra.mxu0 %v355
        %825 = vmatprep.subr.mxu0 %v362
        %826 = vmatpush1.msra.mxu0 %v361
        %827 = vmatprep.subr.mxu0 %v368
        %828 = vmatpush1.msra.mxu0 %v367
        %829 = vmatprep.subr.mxu0 %v374
        %830 = vmatpush1.msra.mxu0 %v373
        %831 = vmatprep.subr.mxu0 %v380
        %832 = vmatpush1.msra.mxu0 %v379
        %833 = vmatprep.subr.mxu0 %v386
        %834 = vmatpush1.msra.mxu0 %v385
        %835 = vmatprep.subr.mxu0 %v392
        %836 = vmatpush1.msra.mxu0 %v391
        %837 = vmatprep.subr.mxu0 %v398
        %838 = vmatpush1.msra.mxu0 %v397
        %839 = vmatprep.subr.mxu0 %v404
        %840 = vmatpush1.msra.mxu0 %v403
        %841 = vmatprep.subr.mxu0 %v410
        %842 = vmatpush1.msra.mxu0 %v409
        %843 = vmatprep.subr.mxu0 %v416
        %844 = vmatpush1.msra.mxu0 %v415
        %845 = vmatprep.subr.mxu0 %v422
        %846 = vmatpush1.msra.mxu0 %v421
        %847 = vmatprep.subr.mxu0 %v428
        %848 = vmatpush1.msra.mxu0 %v427
        %849 = vmatprep.subr.mxu0 %v434
        %850 = vmatpush1.msra.mxu0 %v433
        %851 = vmatprep.subr.mxu0 %v440
        %852 = vmatpush1.msra.mxu0 %v439
        %853 = vmatprep.mubr.f32.mxu0 %v244
        %854 = vmatmul.mubr.f32.gmra.mrb[0].mxu0 %v243
        %v855 = vpop.f32.mrb[0].mxu0
        %v856 = vadd.f32 0.0, %v855
        %v857 = vpop.f32.mrb[0].mxu0
        %v858 = vadd.f32 0.0, %v857
        %859 = vmatprep.mubr.f32.mxu0 %v248
        %860 = vmatmul.mubr.f32.gmra.mrb[0].mxu0 %v247
        %v861 = vpop.f32.mrb[0].mxu0
        %v862 = vadd.f32 0.0, %v861
        %v863 = vpop.f32.mrb[0].mxu0
        %v864 = vadd.f32 0.0, %v863
        %865 = vdwg.mxu0
        %866 = vmatprep.subr.mxu0 %v446
        %867 = vmatpush1.msra.mxu0 %v445
        %868 = vmatprep.subr.mxu0 %v452
        %869 = vmatpush1.msra.mxu0 %v451
        %870 = vmatprep.subr.mxu0 %v458
        %871 = vmatpush1.msra.mxu0 %v457
        %872 = vmatprep.subr.mxu0 %v464
        %873 = vmatpush1.msra.mxu0 %v463
        %874 = vmatprep.subr.mxu0 %v470
        %875 = vmatpush1.msra.mxu0 %v469
        %876 = vmatprep.subr.mxu0 %v476
        %877 = vmatpush1.msra.mxu0 %v475
        %878 = vmatprep.subr.mxu0 %v482
        %879 = vmatpush1.msra.mxu0 %v481
        %880 = vmatprep.subr.mxu0 %v488
        %881 = vmatpush1.msra.mxu0 %v487
        %882 = vmatprep.subr.mxu0 %v494
        %883 = vmatpush1.msra.mxu0 %v493
        %884 = vmatprep.subr.mxu0 %v500
        %885 = vmatpush1.msra.mxu0 %v499
        %886 = vmatprep.subr.mxu0 %v506
        %887 = vmatpush1.msra.mxu0 %v505
        %888 = vmatprep.subr.mxu0 %v512
        %889 = vmatpush1.msra.mxu0 %v511
        %890 = vmatprep.subr.mxu0 %v518
        %891 = vmatpush1.msra.mxu0 %v517
        %892 = vmatprep.subr.mxu0 %v524
        %893 = vmatpush1.msra.mxu0 %v523
        %894 = vmatprep.subr.mxu0 %v530
        %895 = vmatpush1.msra.mxu0 %v529
        %896 = vmatprep.subr.mxu0 %v536
        %897 = vmatpush1.msra.mxu0 %v535
        %898 = vmatprep.subr.mxu0 %v542
        %899 = vmatpush1.msra.mxu0 %v541
        %900 = vmatprep.subr.mxu0 %v548
        %901 = vmatpush1.msra.mxu0 %v547
        %902 = vmatprep.subr.mxu0 %v554
        %903 = vmatpush1.msra.mxu0 %v553
        %904 = vmatprep.subr.mxu0 %v560
        %905 = vmatpush1.msra.mxu0 %v559
        %906 = vmatprep.subr.mxu0 %v566
        %907 = vmatpush1.msra.mxu0 %v565
        %908 = vmatprep.subr.mxu0 %v572
        %909 = vmatpush1.msra.mxu0 %v571
        %910 = vmatprep.subr.mxu0 %v578
        %911 = vmatpush1.msra.mxu0 %v577
        %912 = vmatprep.subr.mxu0 %v584
        %913 = vmatpush1.msra.mxu0 %v583
        %914 = vmatprep.subr.mxu0 %v590
        %915 = vmatpush1.msra.mxu0 %v589
        %916 = vmatprep.subr.mxu0 %v596
        %917 = vmatpush1.msra.mxu0 %v595
        %918 = vmatprep.subr.mxu0 %v602
        %919 = vmatpush1.msra.mxu0 %v601
        %920 = vmatprep.subr.mxu0 %v608
        %921 = vmatpush1.msra.mxu0 %v607
        %922 = vmatprep.subr.mxu0 %v614
        %923 = vmatpush1.msra.mxu0 %v613
        %924 = vmatprep.subr.mxu0 %v620
        %925 = vmatpush1.msra.mxu0 %v619
        %926 = vmatprep.subr.mxu0 %v626
        %927 = vmatpush1.msra.mxu0 %v625
        %928 = vmatprep.subr.mxu0 %v632
        %929 = vmatpush1.msra.mxu0 %v631
        %930 = vmatprep.mubr.f32.mxu0 %v246
        %931 = vmatmul.mubr.f32.gmra.mrb[0].mxu0 %v245
        %v932 = vpop.f32.mrb[0].mxu0
        %v933 = vadd.f32 %v856, %v932
        %v934 = vpop.f32.mrb[0].mxu0
        %v935 = vadd.f32 %v858, %v934
        %936 = vmatprep.mubr.f32.mxu0 %v250
        %937 = vmatmul.mubr.f32.gmra.mrb[0].mxu0 %v249
        %v938 = vpop.f32.mrb[0].mxu0
        %v939 = vadd.f32 %v862, %v938
        %v940 = vpop.f32.mrb[0].mxu0
        %v941 = vadd.f32 %v864, %v940
        %942 = vdwg.mxu0
        %943 = vmatprep.subr.mxu0 %v256
        %944 = vmatpush1.msra.mxu0 %v255
        %945 = vmatprep.subr.mxu0 %v262
        %946 = vmatpush1.msra.mxu0 %v261
        %947 = vmatprep.subr.mxu0 %v268
        %948 = vmatpush1.msra.mxu0 %v267
        %949 = vmatprep.subr.mxu0 %v274
        %950 = vmatpush1.msra.mxu0 %v273
        %951 = vmatprep.subr.mxu0 %v280
        %952 = vmatpush1.msra.mxu0 %v279
        %953 = vmatprep.subr.mxu0 %v286
        %954 = vmatpush1.msra.mxu0 %v285
        %955 = vmatprep.subr.mxu0 %v292
        %956 = vmatpush1.msra.mxu0 %v291
        %957 = vmatprep.subr.mxu0 %v298
        %958 = vmatpush1.msra.mxu0 %v297
        %959 = vmatprep.subr.mxu0 %v304
        %960 = vmatpush1.msra.mxu0 %v303
        %961 = vmatprep.subr.mxu0 %v310
        %962 = vmatpush1.msra.mxu0 %v309
        %963 = vmatprep.subr.mxu0 %v316
        %964 = vmatpush1.msra.mxu0 %v315
        %965 = vmatprep.subr.mxu0 %v322
        %966 = vmatpush1.msra.mxu0 %v321
        %967 = vmatprep.subr.mxu0 %v328
        %968 = vmatpush1.msra.mxu0 %v327
        %969 = vmatprep.subr.mxu0 %v334
        %970 = vmatpush1.msra.mxu0 %v333
        %971 = vmatprep.subr.mxu0 %v340
        %972 = vmatpush1.msra.mxu0 %v339
        %973 = vmatprep.subr.mxu0 %v346
        %974 = vmatpush1.msra.mxu0 %v345
        %975 = vmatprep.subr.mxu0 %v352
        %976 = vmatpush1.msra.mxu0 %v351
        %977 = vmatprep.subr.mxu0 %v358
        %978 = vmatpush1.msra.mxu0 %v357
        %979 = vmatprep.subr.mxu0 %v364
        %980 = vmatpush1.msra.mxu0 %v363
        %981 = vmatprep.subr.mxu0 %v370
        %982 = vmatpush1.msra.mxu0 %v369
        %983 = vmatprep.subr.mxu0 %v376
        %984 = vmatpush1.msra.mxu0 %v375
        %985 = vmatprep.subr.mxu0 %v382
        %986 = vmatpush1.msra.mxu0 %v381
        %987 = vmatprep.subr.mxu0 %v388
        %988 = vmatpush1.msra.mxu0 %v387
        %989 = vmatprep.subr.mxu0 %v394
        %990 = vmatpush1.msra.mxu0 %v393
        %991 = vmatprep.subr.mxu0 %v400
        %992 = vmatpush1.msra.mxu0 %v399
        %993 = vmatprep.subr.mxu0 %v406
        %994 = vmatpush1.msra.mxu0 %v405
        %995 = vmatprep.subr.mxu0 %v412
        %996 = vmatpush1.msra.mxu0 %v411
        %997 = vmatprep.subr.mxu0 %v418
        %998 = vmatpush1.msra.mxu0 %v417
        %999 = vmatprep.subr.mxu0 %v424
        %1000 = vmatpush1.msra.mxu0 %v423
        %1001 = vmatprep.subr.mxu0 %v430
        %1002 = vmatpush1.msra.mxu0 %v429
        %1003 = vmatprep.subr.mxu0 %v436
        %1004 = vmatpush1.msra.mxu0 %v435
        %1005 = vmatprep.subr.mxu0 %v442
        %1006 = vmatpush1.msra.mxu0 %v441
        %1007 = vmatprep.mubr.f32.mxu0 %v244
        %1008 = vmatmul.mubr.f32.gmra.mrb[0].mxu0 %v243
        %v1009 = vpop.f32.mrb[0].mxu0
        %v1010 = vadd.f32 0.0, %v1009
        %v1011 = vpop.f32.mrb[0].mxu0
        %v1012 = vadd.f32 0.0, %v1011
        %1013 = vmatprep.mubr.f32.mxu0 %v248
        %1014 = vmatmul.mubr.f32.gmra.mrb[0].mxu0 %v247
        %v1015 = vpop.f32.mrb[0].mxu0
        %v1016 = vadd.f32 0.0, %v1015
        %v1017 = vpop.f32.mrb[0].mxu0
        %v1018 = vadd.f32 0.0, %v1017
        %1019 = vdwg.mxu0
        %1020 = vmatprep.subr.mxu0 %v448
        %1021 = vmatpush1.msra.mxu0 %v447
        %1022 = vmatprep.subr.mxu0 %v454
        %1023 = vmatpush1.msra.mxu0 %v453
        %1024 = vmatprep.subr.mxu0 %v460
        %1025 = vmatpush1.msra.mxu0 %v459
        %1026 = vmatprep.subr.mxu0 %v466
        %1027 = vmatpush1.msra.mxu0 %v465
        %1028 = vmatprep.subr.mxu0 %v472
        %1029 = vmatpush1.msra.mxu0 %v471
        %1030 = vmatprep.subr.mxu0 %v478
        %1031 = vmatpush1.msra.mxu0 %v477
        %1032 = vmatprep.subr.mxu0 %v484
        %1033 = vmatpush1.msra.mxu0 %v483
        %1034 = vmatprep.subr.mxu0 %v490
        %1035 = vmatpush1.msra.mxu0 %v489
        %1036 = vmatprep.subr.mxu0 %v496
        %1037 = vmatpush1.msra.mxu0 %v495
        %1038 = vmatprep.subr.mxu0 %v502
        %1039 = vmatpush1.msra.mxu0 %v501
        %1040 = vmatprep.subr.mxu0 %v508
        %1041 = vmatpush1.msra.mxu0 %v507
        %1042 = vmatprep.subr.mxu0 %v514
        %1043 = vmatpush1.msra.mxu0 %v513
        %1044 = vmatprep.subr.mxu0 %v520
        %1045 = vmatpush1.msra.mxu0 %v519
        %1046 = vmatprep.subr.mxu0 %v526
        %1047 = vmatpush1.msra.mxu0 %v525
        %1048 = vmatprep.subr.mxu0 %v532
        %1049 = vmatpush1.msra.mxu0 %v531
        %1050 = vmatprep.subr.mxu0 %v538
        %1051 = vmatpush1.msra.mxu0 %v537
        %1052 = vmatprep.subr.mxu0 %v544
        %1053 = vmatpush1.msra.mxu0 %v543
        %1054 = vmatprep.subr.mxu0 %v550
        %1055 = vmatpush1.msra.mxu0 %v549
        %1056 = vmatprep.subr.mxu0 %v556
        %1057 = vmatpush1.msra.mxu0 %v555
        %1058 = vmatprep.subr.mxu0 %v562
        %1059 = vmatpush1.msra.mxu0 %v561
        %1060 = vmatprep.subr.mxu0 %v568
        %1061 = vmatpush1.msra.mxu0 %v567
        %1062 = vmatprep.subr.mxu0 %v574
        %1063 = vmatpush1.msra.mxu0 %v573
        %1064 = vmatprep.subr.mxu0 %v580
        %1065 = vmatpush1.msra.mxu0 %v579
        %1066 = vmatprep.subr.mxu0 %v586
        %1067 = vmatpush1.msra.mxu0 %v585
        %1068 = vmatprep.subr.mxu0 %v592
        %1069 = vmatpush1.msra.mxu0 %v591
        %1070 = vmatprep.subr.mxu0 %v598
        %1071 = vmatpush1.msra.mxu0 %v597
        %1072 = vmatprep.subr.mxu0 %v604
        %1073 = vmatpush1.msra.mxu0 %v603
        %1074 = vmatprep.subr.mxu0 %v610
        %1075 = vmatpush1.msra.mxu0 %v609
        %1076 = vmatprep.subr.mxu0 %v616
        %1077 = vmatpush1.msra.mxu0 %v615
        %1078 = vmatprep.subr.mxu0 %v622
        %1079 = vmatpush1.msra.mxu0 %v621
        %1080 = vmatprep.subr.mxu0 %v628
        %1081 = vmatpush1.msra.mxu0 %v627
        %1082 = vmatprep.subr.mxu0 %v634
        %1083 = vmatpush1.msra.mxu0 %v633
        %1084 = vmatprep.mubr.f32.mxu0 %v246
        %1085 = vmatmul.mubr.f32.gmra.mrb[0].mxu0 %v245
        %v1086 = vpop.f32.mrb[0].mxu0
        %v1087 = vadd.f32 %v1010, %v1086
        %v1088 = vpop.f32.mrb[0].mxu0
        %v1089 = vadd.f32 %v1012, %v1088
        %1090 = vmatprep.mubr.f32.mxu0 %v250
        %1091 = vmatmul.mubr.f32.gmra.mrb[0].mxu0 %v249
        %v1092 = vpop.f32.mrb[0].mxu0
        %v1093 = vadd.f32 %v1016, %v1092
        %v1094 = vpop.f32.mrb[0].mxu0
        %v1095 = vadd.f32 %v1018, %v1094
        %1096 = vdwg.mxu0
        %v1097 = vmul.f32 %v779, %v779
        %v1098 = vmul.f32 %v781, %v781
        %v1099 = vmul.f32 %v933, %v933
        %v1100 = vmul.f32 %v785, %v785
        %v1101 = vmul.f32 %v787, %v787
        %v1102 = vmul.f32 %v939, %v939
        %v1103 = vmul.f32 %v935, %v935
        %v1104 = vmul.f32 %v1087, %v1087
        %v1105 = vmul.f32 %v1089, %v1089
        %v1106 = vmul.f32 %v941, %v941
        %v1107 = vmul.f32 %v1093, %v1093
        %v1108 = vmul.f32 %v1095, %v1095
        %v1109 = vadd.f32 %v1097, %v1103
        %v1110 = vadd.f32 %v1098, %v1104
        %v1111 = vadd.f32 %v1099, %v1105
        %v1112 = vadd.f32 %v1100, %v1106
        %v1113 = vadd.f32 %v1101, %v1107
        %v1114 = vadd.f32 %v1102, %v1108
        %v1115 = vld [vmem:[#allocation4] sm:$0xff]
        %v1116 = vld [vmem:[#allocation4 + $0x8] sm:$0xff]
        %v1117 = vld [vmem:[#allocation4 + $0x10] sm:$0xff]
        %v1118 = vld [vmem:[#allocation4 + $0x18] sm:$0xff]
        %v1119 = vld [vmem:[#allocation4 + $0x20] sm:$0xff]
        %v1120 = vld [vmem:[#allocation4 + $0x28] sm:$0xff]
        %v1121 = vld [vmem:[#allocation4 + $0x30] sm:$0xff]
        %v1122 = vld [vmem:[#allocation4 + $0x38] sm:$0xff]
        %v1123 = vld [vmem:[#allocation4 + $0x40] sm:$0xff]
        %v1124 = vld [vmem:[#allocation4 + $0x48] sm:$0xff]
        %v1125 = vld [vmem:[#allocation4 + $0x50] sm:$0xff]
        %v1126 = vld [vmem:[#allocation4 + $0x58] sm:$0xff]
        %v1127 = vld [vmem:[#allocation4 + $0x60] sm:$0xff]
        %v1128 = vld [vmem:[#allocation4 + $0x68] sm:$0xff]
        %v1129 = vld [vmem:[#allocation4 + $0x70] sm:$0xff]
        %v1130 = vld [vmem:[#allocation4 + $0x78] sm:$0xff]
        %v1131 = vld [vmem:[#allocation4 + $0x80] sm:$0xff]
        %v1132 = vld [vmem:[#allocation4 + $0x88] sm:$0xff]
        %v1133 = vld [vmem:[#allocation4 + $0x90] sm:$0xff]
        %v1134 = vld [vmem:[#allocation4 + $0x98] sm:$0xff]
        %v1135 = vld [vmem:[#allocation4 + $0xa0] sm:$0xff]
        %v1136 = vld [vmem:[#allocation4 + $0xa8] sm:$0xff]
        %v1137 = vld [vmem:[#allocation4 + $0xb0] sm:$0xff]
        %v1138 = vld [vmem:[#allocation4 + $0xb8] sm:$0xff]
        %v1139 = vld [vmem:[#allocation4 + $0xc0] sm:$0xff]
        %v1140 = vld [vmem:[#allocation4 + $0xc8] sm:$0xff]
        %v1141 = vld [vmem:[#allocation4 + $0xd0] sm:$0xff]
        %v1142 = vld [vmem:[#allocation4 + $0xd8] sm:$0xff]
        %v1143 = vld [vmem:[#allocation4 + $0xe0] sm:$0xff]
        %v1144 = vld [vmem:[#allocation4 + $0xe8] sm:$0xff]
        %v1145 = vld [vmem:[#allocation4 + $0xf0] sm:$0xff]
        %v1146 = vld [vmem:[#allocation4 + $0xf8] sm:$0xff]
        %v1147 = vld [vmem:[#allocation4 + $0x100] sm:$0xff]
        %v1148 = vld [vmem:[#allocation4 + $0x108] sm:$0xff]
        %v1149 = vld [vmem:[#allocation4 + $0x110] sm:$0xff]
        %v1150 = vld [vmem:[#allocation4 + $0x118] sm:$0xff]
        %v1151 = vld [vmem:[#allocation4 + $0x120] sm:$0xff]
        %v1152 = vld [vmem:[#allocation4 + $0x128] sm:$0xff]
        %v1153 = vld [vmem:[#allocation4 + $0x130] sm:$0xff]
        %v1154 = vld [vmem:[#allocation4 + $0x138] sm:$0xff]
        %v1155 = vld [vmem:[#allocation4 + $0x140] sm:$0xff]
        %v1156 = vld [vmem:[#allocation4 + $0x148] sm:$0xff]
        %v1157 = vld [vmem:[#allocation4 + $0x150] sm:$0xff]
        %v1158 = vld [vmem:[#allocation4 + $0x158] sm:$0xff]
        %v1159 = vld [vmem:[#allocation4 + $0x160] sm:$0xff]
        %v1160 = vld [vmem:[#allocation4 + $0x168] sm:$0xff]
        %v1161 = vld [vmem:[#allocation4 + $0x170] sm:$0xff]
        %v1162 = vld [vmem:[#allocation4 + $0x178] sm:$0xff]
        %1163 = vmatprep.subr.mxu0 0.0
        %1164 = vmatpush1.msra.mxu0 %v1115
        %1165 = vmatprep.subr.mxu0 0.0
        %1166 = vmatpush1.msra.mxu0 %v1116
        %1167 = vmatprep.subr.mxu0 0.0
        %1168 = vmatpush1.msra.mxu0 %v1117
        %1169 = vmatprep.subr.mxu0 0.0
        %1170 = vmatpush1.msra.mxu0 %v1118
        %1171 = vmatprep.subr.mxu0 0.0
        %1172 = vmatpush1.msra.mxu0 %v1119
        %1173 = vmatprep.subr.mxu0 0.0
        %1174 = vmatpush1.msra.mxu0 %v1120
        %1175 = vmatprep.subr.mxu0 0.0
        %1176 = vmatpush1.msra.mxu0 %v1121
        %1177 = vmatprep.subr.mxu0 0.0
        %1178 = vmatpush1.msra.mxu0 %v1122
        %1179 = vmatprep.subr.mxu0 0.0
        %1180 = vmatpush1.msra.mxu0 %v1123
        %1181 = vmatprep.subr.mxu0 0.0
        %1182 = vmatpush1.msra.mxu0 %v1124
        %1183 = vmatprep.subr.mxu0 0.0
        %1184 = vmatpush1.msra.mxu0 %v1125
        %1185 = vmatprep.subr.mxu0 0.0
        %1186 = vmatpush1.msra.mxu0 %v1126
        %1187 = vmatprep.subr.mxu0 0.0
        %1188 = vmatpush1.msra.mxu0 %v1127
        %1189 = vmatprep.subr.mxu0 0.0
        %1190 = vmatpush1.msra.mxu0 %v1128
        %1191 = vmatprep.subr.mxu0 0.0
        %1192 = vmatpush1.msra.mxu0 %v1129
        %1193 = vmatprep.subr.mxu0 0.0
        %1194 = vmatpush1.msra.mxu0 %v1130
        %1195 = vmatprep.subr.mxu0 0.0
        %1196 = vmatpush1.msra.mxu0 %v1131
        %1197 = vmatprep.subr.mxu0 0.0
        %1198 = vmatpush1.msra.mxu0 %v1132
        %1199 = vmatprep.subr.mxu0 0.0
        %1200 = vmatpush1.msra.mxu0 %v1133
        %1201 = vmatprep.subr.mxu0 0.0
        %1202 = vmatpush1.msra.mxu0 %v1134
        %1203 = vmatprep.subr.mxu0 0.0
        %1204 = vmatpush1.msra.mxu0 %v1135
        %1205 = vmatprep.subr.mxu0 0.0
        %1206 = vmatpush1.msra.mxu0 %v1136
        %1207 = vmatprep.subr.mxu0 0.0
        %1208 = vmatpush1.msra.mxu0 %v1137
        %1209 = vmatprep.subr.mxu0 0.0
        %1210 = vmatpush1.msra.mxu0 %v1138
        %1211 = vmatprep.subr.mxu0 0.0
        %1212 = vmatpush1.msra.mxu0 %v1139
        %1213 = vmatprep.subr.mxu0 0.0
        %1214 = vmatpush1.msra.mxu0 %v1140
        %1215 = vmatprep.subr.mxu0 0.0
        %1216 = vmatpush1.msra.mxu0 %v1141
        %1217 = vmatprep.subr.mxu0 0.0
        %1218 = vmatpush1.msra.mxu0 %v1142
        %1219 = vmatprep.subr.mxu0 0.0
        %1220 = vmatpush1.msra.mxu0 %v1143
        %1221 = vmatprep.subr.mxu0 0.0
        %1222 = vmatpush1.msra.mxu0 %v1144
        %1223 = vmatprep.subr.mxu0 0.0
        %1224 = vmatpush1.msra.mxu0 %v1145
        %1225 = vmatprep.subr.mxu0 0.0
        %1226 = vmatpush1.msra.mxu0 %v1146
        %1227 = vmatprep.mubr.f32.mxu0 %v1110
        %1228 = vmatmul.mubr.f32.gmra.mrb[0].mxu0 %v1109
        %v1229 = vpop.f32.mrb[0].mxu0
        %v1230 = vadd.f32 0.0, %v1229
        %v1231 = vpop.f32.mrb[0].mxu0
        %1232 = vmatprep.mubr.f32.mxu0 %v1113
        %1233 = vmatmul.mubr.f32.gmra.mrb[0].mxu0 %v1112
        %v1234 = vpop.f32.mrb[0].mxu0
        %v1235 = vadd.f32 0.0, %v1234
        %v1236 = vpop.f32.mrb[0].mxu0
        %1237 = vdwg.mxu0
        %1238 = vmatprep.subr.mxu0 0.0
        %1239 = vmatpush1.msra.mxu0 %v1147
        %1240 = vmatprep.subr.mxu0 0.0
        %1241 = vmatpush1.msra.mxu0 %v1148
        %1242 = vmatprep.subr.mxu0 0.0
        %1243 = vmatpush1.msra.mxu0 %v1149
        %1244 = vmatprep.subr.mxu0 0.0
        %1245 = vmatpush1.msra.mxu0 %v1150
        %1246 = vmatprep.subr.mxu0 0.0
        %1247 = vmatpush1.msra.mxu0 %v1151
        %1248 = vmatprep.subr.mxu0 0.0
        %1249 = vmatpush1.msra.mxu0 %v1152
        %1250 = vmatprep.subr.mxu0 0.0
        %1251 = vmatpush1.msra.mxu0 %v1153
        %1252 = vmatprep.subr.mxu0 0.0
        %1253 = vmatpush1.msra.mxu0 %v1154
        %1254 = vmatprep.subr.mxu0 0.0
        %1255 = vmatpush1.msra.mxu0 %v1155
        %1256 = vmatprep.subr.mxu0 0.0
        %1257 = vmatpush1.msra.mxu0 %v1156
        %1258 = vmatprep.subr.mxu0 0.0
        %1259 = vmatpush1.msra.mxu0 %v1157
        %1260 = vmatprep.subr.mxu0 0.0
        %1261 = vmatpush1.msra.mxu0 %v1158
        %1262 = vmatprep.subr.mxu0 0.0
        %1263 = vmatpush1.msra.mxu0 %v1159
        %1264 = vmatprep.subr.mxu0 0.0
        %1265 = vmatpush1.msra.mxu0 %v1160
        %1266 = vmatprep.subr.mxu0 0.0
        %1267 = vmatpush1.msra.mxu0 %v1161
        %1268 = vmatprep.subr.mxu0 0.0
        %1269 = vmatpush1.msra.mxu0 %v1162
        %1270 = vmatprep.subr.mxu0 0.0
        %1271 = vmatpush1.msra.mxu0 0.0
        %1272 = vmatprep.subr.mxu0 0.0
        %1273 = vmatpush1.msra.mxu0 0.0
        %1274 = vmatprep.subr.mxu0 0.0
        %1275 = vmatpush1.msra.mxu0 0.0
        %1276 = vmatprep.subr.mxu0 0.0
        %1277 = vmatpush1.msra.mxu0 0.0
        %1278 = vmatprep.subr.mxu0 0.0
        %1279 = vmatpush1.msra.mxu0 0.0
        %1280 = vmatprep.subr.mxu0 0.0
        %1281 = vmatpush1.msra.mxu0 0.0
        %1282 = vmatprep.subr.mxu0 0.0
        %1283 = vmatpush1.msra.mxu0 0.0
        %1284 = vmatprep.subr.mxu0 0.0
        %1285 = vmatpush1.msra.mxu0 0.0
        %1286 = vmatprep.subr.mxu0 0.0
        %1287 = vmatpush1.msra.mxu0 0.0
        %1288 = vmatprep.subr.mxu0 0.0
        %1289 = vmatpush1.msra.mxu0 0.0
        %1290 = vmatprep.subr.mxu0 0.0
        %1291 = vmatpush1.msra.mxu0 0.0
        %1292 = vmatprep.subr.mxu0 0.0
        %1293 = vmatpush1.msra.mxu0 0.0
        %1294 = vmatprep.subr.mxu0 0.0
        %1295 = vmatpush1.msra.mxu0 0.0
        %1296 = vmatprep.subr.mxu0 0.0
        %1297 = vmatpush1.msra.mxu0 0.0
        %1298 = vmatprep.subr.mxu0 0.0
        %1299 = vmatpush1.msra.mxu0 0.0
        %1300 = vmatprep.subr.mxu0 0.0
        %1301 = vmatpush1.msra.mxu0 0.0
        %1302 = vmatprep.mubr.f32.mxu0 0.0
        %1303 = vmatmul.mubr.f32.gmra.mrb[0].mxu0 %v1111
        %v1304 = vpop.f32.mrb[0].mxu0
        %v1305 = vadd.f32 %v1230, %v1304
        %v1306 = vpop.f32.mrb[0].mxu0
        %1307 = vmatprep.mubr.f32.mxu0 0.0
        %1308 = vmatmul.mubr.f32.gmra.mrb[0].mxu0 %v1114
        %v1309 = vpop.f32.mrb[0].mxu0
        %v1310 = vadd.f32 %v1235, %v1309
        %v1311 = vpop.f32.mrb[0].mxu0
        %1312 = vdwg.mxu0
        %v1313 = vmax.f32 %v1305, 1.1920929e-07
        %v1314 = vmax.f32 %v1310, 1.1920929e-07
        %v1315 = vlog2.pop %v1313
        %v1316 = vmul.f32 %v1315, 0.6931472
        %v1317 = vlog2.pop %v1314
        %v1318 = vmul.f32 %v1317, 0.6931472
        %1319 = vst [vmem:[%s241] sm:$0xff] %v1316
        %1320 = vst [vmem:[%s241 + $0x8] sm:$0xff] %v1318
        %s1321 = smul.u32 2, %s21
        %p1322 = scmp.lt.s32.totalorder %s20, 1
        %s1323 = scalar_select %p1322, %s20, 1
        %p1324 = scmp.lt.s32.totalorder %s1321, 1
        %s1325 = scalar_select %p1324, %s1321, 1
        %s1326 = smul.addr %s1323, 2
        %s1327 = sadd.s32 %s1325, %s1326
        %s1328 = smul.addr %s1327, 8
        %s1329 = scalar_lea.vmem %s3, %s1328
        // Predicated region
        $region41: #{ast_feature.1} parent=31 // pred_check
          %p1330 = pneg %p118
        $region42: #{ast_feature.1} parent=31 // pred_check_branch
          %1332 = sbr.rel (%p1330) target = $region44
        $region43: #{ast_feature.1} parent=31 // pred_region
          %s1333 = smul.u32 2, %s21
        $region44: #{ast_feature.1} parent=31 // pred_fallthru
          _
      $region32: #{ast_feature.1} parent=5 // pred_fallthru
        _
      %p1334 = scmp.le.s32.totalorder 2, %s11
      // Predicated region
      $region45: #{ast_feature.1} parent=5 // pred_check
        %p1335 = pneg %p1334
      $region46: #{ast_feature.1} parent=5 // pred_check_branch
        %1337 = sbr.rel (%p1335) target = $region48
      $region47: #{ast_feature.1} parent=5 // pred_region
        %s1338 = ssub.s32 %s11, 2
        // Predicated region
        $region49: #{ast_feature.1} parent=47 // pred_check
          %p1339 = pneg %p124
        $region50: #{ast_feature.1} parent=47 // pred_check_branch
          %1341 = sbr.rel (%p1339) target = $region52
        $region51: #{ast_feature.1} parent=47 // pred_region
          %s1342 = smul.u32 2, %s23
          %p1343 = scmp.lt.s32.totalorder %s22, 1
          %s1344 = scalar_select %p1343, %s22, 1
          %p1345 = scmp.lt.s32.totalorder %s1342, 1
          %s1346 = scalar_select %p1345, %s1342, 1
          %s1347 = smul.addr %s1344, 2
          %s1348 = sadd.s32 %s1346, %s1347
          %s1349 = smul.addr %s1348, 8
          %s1350 = scalar_lea.vmem %s3, %s1349
        $region52: #{ast_feature.1} parent=47 // pred_fallthru
          _
      $region48: #{ast_feature.1} parent=5 // pred_fallthru
        _
    $region6: #{ast_feature.1} parent=1 // loop_footer
      %s15 = sadd.s32 1, %s11
    $region7: #{ast_feature.1} parent=1 // loop_footer_branch
      %10 = sbr.rel target = $region3
    $region8: #{ast_feature.1} parent=1 // loop_exit
      _
    %1351 = vsyncpa [#allocation3], 1
    %s1352 = scalar_lea.sflag [#allocation3], 1
    %1353 = vsyncpa %s1352, 1
    %1354 = vsyncpa [#allocation5], 1

</llo_original>
